<compile_context>
chip_gen: v6e
topology: v6e:2x2x1
jax: 0.10.0
libtpu: 0.0.40
codegen_flags: <defaults>
</compile_context>

<pallas_src>
import jax
import jax.numpy as jnp
import numpy as np
from jax import lax
from jax.experimental import pallas as pl
from jax.experimental.pallas import tpu as pltpu

# ---- problem sizes (small, deterministic) ------------------------------------
B = 2              # batch
CIN = 4            # input channels
CH = 8             # hidden channels
H = 16             # spatial height
W = 16             # spatial width
K = 3              # conv kernel size
P = K // 2         # padding
HW = H * W         # 256
NLANES = B * HW    # 512 -> lane axis (batch folded into lanes, lane dense)
CTOT = CIN + CH    # 12
NTAP = K * K       # 9
XOFF = NTAP * CH   # 72  : start row of the x-tap region in the im2col matrix
NCOLS = 2 * NTAP * CH  # 144: h-tap rows (72) + zero-padded x-tap rows (72)
TAPS = tuple((dy - P, dx - P) for dy in range(K) for dx in range(K))  # (oy, ox)


def _build_tap_masks():
    """(NTAP, B*HW) f32 validity masks: 1 where the shifted pixel is inside
    the HxW image (same mask replicated for every batch element)."""
    m = np.zeros((NTAP, NLANES), np.float32)
    ys = np.arange(H)
    xs = np.arange(W)
    for t, (oy, ox) in enumerate(TAPS):
        vy = (ys + oy >= 0) & (ys + oy < H)
        vx = (xs + ox >= 0) & (xs + ox < W)
        valid = (vy[:, None] & vx[None, :]).astype(np.float32).reshape(-1)
        m[t] = np.tile(valid, B)
    return m


TAP_MASKS = _build_tap_masks()


# ---- Pallas kernel ------------------------------------------------------------
def convgru_kernel(x_ref, h_ref, masks_ref, wru_ref, bru_ref, wo_ref, bo_ref,
                   out_ref, xhcol_ref):
    # x_ref    : (CIN, 512)   input, lanes = [batch0 pixels | batch1 pixels]
    # h_ref    : (CH, 512)    hidden state, same lane layout
    # masks_ref: (NTAP, 512)  per-tap validity masks (precomputed host-side)
    # wru_ref  : (2*CH, 144)  fused reset+update weight slab
    # bru_ref  : (2*CH, 1)
    # wo_ref   : (CH, 144)    out-gate weight slab
    # bo_ref   : (CH, 1)
    # out_ref  : (CH, 512)    new hidden state (lane-dense store)
    # xhcol_ref: (144, 512)   im2col matrix: rows [0,72) = 9 h-tap blocks of 8,
    #                         rows [72,144) = 9 x-tap blocks (4 real + 4 zero)
    x = x_ref[...]
    h = h_ref[...]

    # Zero the 4 padding rows of every x-tap block once (their weight columns
    # are zero, but stale VMEM could hold NaN/Inf and 0*NaN = NaN).
    zpad = jnp.zeros((CH - CIN, NLANES), jnp.float32)
    for t in range(NTAP):
        xhcol_ref[XOFF + t * CH + CIN:XOFF + (t + 1) * CH, :] = zpad

    # ---- im2col via XLU rolls + precomputed masks; aligned 8-row h stores ----
    for t, (oy, ox) in enumerate(TAPS):
        off = oy * W + ox
        if off == 0:
            h_t, x_t = h, x                       # center tap: no shift, no mask
        else:
            s = (-off) % NLANES                   # static non-negative lane shift
            m = masks_ref[t:t + 1, :]             # (1, 512)
            h_t = pltpu.roll(h, shift=s, axis=1) * m
            x_t = pltpu.roll(x, shift=s, axis=1) * m
        xhcol_ref[t * CH:(t + 1) * CH, :] = h_t                      # aligned 8 rows
        xhcol_ref[XOFF + t * CH:XOFF + t * CH + CIN, :] = x_t        # aligned start

    # ---- fused reset/update gates: one (16 x 144) @ (144 x 512) MXU matmul ----
    pre_ru = jnp.dot(wru_ref[...], xhcol_ref[...],
                     preferred_element_type=jnp.float32) + bru_ref[...]
    reset = jax.nn.sigmoid(pre_ru[:CH, :])        # (CH, 512)
    update = jax.nn.sigmoid(pre_ru[CH:, :])       # (CH, 512)

    # ---- overwrite h-tap rows in place with shifted reset * (masked) h-tap ----
    # Wrapped lanes from the roll only land where the h-tap block is already 0.
    for t, (oy, ox) in enumerate(TAPS):
        off = oy * W + ox
        r_t = reset if off == 0 else pltpu.roll(reset, shift=(-off) % NLANES, axis=1)
        xhcol_ref[t * CH:(t + 1) * CH, :] = xhcol_ref[t * CH:(t + 1) * CH, :] * r_t

    # ---- out gate: single (8 x 144) @ (144 x 512) MXU matmul -------------------
    out = jnp.tanh(jnp.dot(wo_ref[...], xhcol_ref[...],
                           preferred_element_type=jnp.float32) + bo_ref[...])

    # ---- GRU update; lane-dense (8, 512) store ---------------------------------
    out_ref[...] = (1.0 - update) * h + update * out


# ---- wrapper ------------------------------------------------------------------
def _gate_cols(w_oihw):
    """PyTorch OIHW (O, CIN+CH, 3, 3) conv weight -> (O, 144) columns matching
    the in-kernel im2col row order: 9 h-tap blocks of 8 columns, then 9 x-tap
    blocks of 4 real + 4 zero columns (tap-major, channel-minor)."""
    o = w_oihw.shape[0]
    w = w_oihw.astype(jnp.float32)
    wh = jnp.transpose(w[:, CIN:], (0, 2, 3, 1)).reshape(o, NTAP * CH)
    wx = jnp.transpose(w[:, :CIN], (0, 2, 3, 1)).reshape(o, NTAP, CIN)
    wx = jnp.pad(wx, ((0, 0), (0, 0), (0, CH - CIN))).reshape(o, NTAP * CH)
    return jnp.concatenate([wh, wx], axis=1)


@jax.jit
def conv_gru_cell_pallas(x_nchw, h_nchw, wr, br, wu, bu, wo, bo):
    """x: (B, CIN, H, W); h: (B, CH, H, W); wr/wu/wo in PyTorch OIHW layout
    (CH, CIN+CH, K, K); biases (CH,). Returns the new hidden state, NCHW."""
    # Fold batch into the lane axis: (C, B*HW), fully lane dense.
    x2 = jnp.transpose(x_nchw.astype(jnp.float32).reshape(B, CIN, HW),
                       (1, 0, 2)).reshape(CIN, NLANES)
    h2 = jnp.transpose(h_nchw.astype(jnp.float32).reshape(B, CH, HW),
                       (1, 0, 2)).reshape(CH, NLANES)
    masks = jnp.asarray(TAP_MASKS)

    # Matmul-ready weight slabs; reset & update fused on the out-channel axis.
    w_ru = jnp.concatenate([_gate_cols(wr), _gate_cols(wu)], axis=0)  # (16, 144)
    w_o = _gate_cols(wo)                                              # (8, 144)
    b_ru = jnp.concatenate([br, bu]).astype(jnp.float32)[:, None]     # (16, 1)
    b_o = bo.astype(jnp.float32)[:, None]                             # (8, 1)

    out = pl.pallas_call(
        convgru_kernel,
        out_shape=jax.ShapeDtypeStruct((CH, NLANES), jnp.float32),
        grid_spec=pltpu.PrefetchScalarGridSpec(
            num_scalar_prefetch=0,
            grid=(1,),                              # single fused invocation
            in_specs=[
                pl.BlockSpec((CIN, NLANES), lambda i: (0, 0)),
                pl.BlockSpec((CH, NLANES), lambda i: (0, 0)),
                pl.BlockSpec((NTAP, NLANES), lambda i: (0, 0)),
                pl.BlockSpec((2 * CH, NCOLS), lambda i: (0, 0)),
                pl.BlockSpec((2 * CH, 1), lambda i: (0, 0)),
                pl.BlockSpec((CH, NCOLS), lambda i: (0, 0)),
                pl.BlockSpec((CH, 1), lambda i: (0, 0)),
            ],
            out_specs=pl.BlockSpec((CH, NLANES), lambda i: (0, 0)),
            scratch_shapes=[
                pltpu.VMEM((NCOLS, NLANES), jnp.float32),   # im2col matrix
            ],
        ),
        compiler_params=pltpu.CompilerParams(
            dimension_semantics=("arbitrary",)),
    )(x2, h2, masks, w_ru, b_ru, w_o, b_o)

    # (CH, B*HW) -> (B, CH, H, W): tiny wrapper-side reshape/transpose.
    return out.reshape(CH, B, H, W).transpose(1, 0, 2, 3)


# ---- pure-JAX reference (mirrors the PyTorch forward exactly) ------------------
def conv_gru_cell_ref(x, h, wr_t, br, wu_t, bu, wo_t, bo):
    def conv(w_oihw, b, inp):
        y = lax.conv_general_dilated(
            inp, w_oihw, window_strides=(1, 1),
            padding=[(P, P), (P, P)],
            dimension_numbers=('NCHW', 'OIHW', 'NCHW'))
        return y + b[None, :, None, None]

    combined = jnp.concatenate([x, h], axis=1)
    reset = jax.nn.sigmoid(conv(wr_t, br, combined))
    update = jax.nn.sigmoid(conv(wu_t, bu, combined))
    combined_r = jnp.concatenate([x, reset * h], axis=1)
    out = jnp.tanh(conv(wo_t, bo, combined_r))
    return (1.0 - update) * h + update * out


if __name__ == "__main__":
    key = jax.random.PRNGKey(0)
    kx, kh, k1, k2, k3, k4, k5, k6 = jax.random.split(key, 8)

    x = jax.random.normal(kx, (B, CIN, H, W), jnp.float32)
    hidden = jax.random.normal(kh, (B, CH, H, W), jnp.float32)
    # NOTE: the PyTorch `hidden_state is None` branch is handled by the caller
    # (pass zeros of the hidden shape); this kernel implements the main path.

    # deterministic synthetic parameters (PyTorch Conv2d weight layout: O,I,kH,kW)
    wr_t = jax.random.normal(k1, (CH, CTOT, K, K), jnp.float32) * 0.1
    wu_t = jax.random.normal(k2, (CH, CTOT, K, K), jnp.float32) * 0.1
    wo_t = jax.random.normal(k3, (CH, CTOT, K, K), jnp.float32) * 0.1
    br = jax.random.normal(k4, (CH,), jnp.float32) * 0.1
    bu = jax.random.normal(k5, (CH,), jnp.float32) * 0.1
    bo = jax.random.normal(k6, (CH,), jnp.float32) * 0.1

    new_h = conv_gru_cell_pallas(x, hidden, wr_t, br, wu_t, bu, wo_t, bo)
    new_h = jax.block_until_ready(new_h)

    ref = conv_gru_cell_ref(x, hidden, wr_t, br, wu_t, bu, wo_t, bo)
    np.testing.assert_allclose(np.asarray(new_h), np.asarray(ref),
                               rtol=1e-4, atol=1e-4)
    print("KERNEL_OK")
</pallas_src>

<mosaic_0001>
module attributes {stable_mosaic.version = 11 : i64} {
  func.func @convgru_kernel(%arg0: i32, %arg1: memref<4x512xf32, #tpu.memory_space<vmem>>, %arg2: memref<8x512xf32, #tpu.memory_space<vmem>>, %arg3: memref<9x512xf32, #tpu.memory_space<vmem>>, %arg4: memref<16x144xf32, #tpu.memory_space<vmem>>, %arg5: memref<16x1xf32, #tpu.memory_space<vmem>>, %arg6: memref<8x144xf32, #tpu.memory_space<vmem>>, %arg7: memref<8x1xf32, #tpu.memory_space<vmem>>, %arg8: memref<8x512xf32, #tpu.memory_space<vmem>>, %arg9: memref<144x512xf32, #tpu.memory_space<vmem>>) attributes {dimension_semantics = [#tpu.dimension_semantics<arbitrary>], iteration_bounds = array<i64: 1>, scalar_prefetch = 0 : i64, scratch_operands = 1 : i64, tpu.core_type = #tpu.core_type<tc>, window_params = [{pipeline_mode = #tpu.pipeline_mode<synchronous>, transform_indices = @transform_0, window_bounds = array<i64: 4, 512>}, {pipeline_mode = #tpu.pipeline_mode<synchronous>, transform_indices = @transform_1, window_bounds = array<i64: 8, 512>}, {pipeline_mode = #tpu.pipeline_mode<synchronous>, transform_indices = @transform_2, window_bounds = array<i64: 9, 512>}, {pipeline_mode = #tpu.pipeline_mode<synchronous>, transform_indices = @transform_3, window_bounds = array<i64: 16, 144>}, {pipeline_mode = #tpu.pipeline_mode<synchronous>, transform_indices = @transform_4, window_bounds = array<i64: 16, 1>}, {pipeline_mode = #tpu.pipeline_mode<synchronous>, transform_indices = @transform_5, window_bounds = array<i64: 8, 144>}, {pipeline_mode = #tpu.pipeline_mode<synchronous>, transform_indices = @transform_6, window_bounds = array<i64: 8, 1>}, {pipeline_mode = #tpu.pipeline_mode<synchronous>, transform_indices = @transform_7, window_bounds = array<i64: 8, 512>}]} {
    %c0 = arith.constant 0 : index
    %c0_0 = arith.constant 0 : index
    %0 = vector.load %arg1[%c0, %c0_0] : memref<4x512xf32, #tpu.memory_space<vmem>>, vector<4x512xf32>
    %c0_1 = arith.constant 0 : index
    %c0_2 = arith.constant 0 : index
    %1 = vector.load %arg2[%c0_1, %c0_2] : memref<8x512xf32, #tpu.memory_space<vmem>>, vector<8x512xf32>
    %cst = arith.constant 0.000000e+00 : f32
    %2 = vector.broadcast %cst : f32 to vector<4x512xf32>
    %c76 = arith.constant 76 : index
    %c0_3 = arith.constant 0 : index
    %3 = vector.load %arg9[%c76, %c0_3] : memref<144x512xf32, #tpu.memory_space<vmem>>, vector<4x512xf32>
    tpu.vector_store %arg9[%c76, %c0_3], %2 {strides = array<i32>} : memref<144x512xf32, #tpu.memory_space<vmem>>, vector<4x512xf32>,
    %c84 = arith.constant 84 : index
    %c0_4 = arith.constant 0 : index
    %4 = vector.load %arg9[%c84, %c0_4] : memref<144x512xf32, #tpu.memory_space<vmem>>, vector<4x512xf32>
    tpu.vector_store %arg9[%c84, %c0_4], %2 {strides = array<i32>} : memref<144x512xf32, #tpu.memory_space<vmem>>, vector<4x512xf32>,
    %c92 = arith.constant 92 : index
    %c0_5 = arith.constant 0 : index
    %5 = vector.load %arg9[%c92, %c0_5] : memref<144x512xf32, #tpu.memory_space<vmem>>, vector<4x512xf32>
    tpu.vector_store %arg9[%c92, %c0_5], %2 {strides = array<i32>} : memref<144x512xf32, #tpu.memory_space<vmem>>, vector<4x512xf32>,
    %c100 = arith.constant 100 : index
    %c0_6 = arith.constant 0 : index
    %6 = vector.load %arg9[%c100, %c0_6] : memref<144x512xf32, #tpu.memory_space<vmem>>, vector<4x512xf32>
    tpu.vector_store %arg9[%c100, %c0_6], %2 {strides = array<i32>} : memref<144x512xf32, #tpu.memory_space<vmem>>, vector<4x512xf32>,
    %c108 = arith.constant 108 : index
    %c0_7 = arith.constant 0 : index
    %7 = vector.load %arg9[%c108, %c0_7] : memref<144x512xf32, #tpu.memory_space<vmem>>, vector<4x512xf32>
    tpu.vector_store %arg9[%c108, %c0_7], %2 {strides = array<i32>} : memref<144x512xf32, #tpu.memory_space<vmem>>, vector<4x512xf32>,
    %c116 = arith.constant 116 : index
    %c0_8 = arith.constant 0 : index
    %8 = vector.load %arg9[%c116, %c0_8] : memref<144x512xf32, #tpu.memory_space<vmem>>, vector<4x512xf32>
    tpu.vector_store %arg9[%c116, %c0_8], %2 {strides = array<i32>} : memref<144x512xf32, #tpu.memory_space<vmem>>, vector<4x512xf32>,
    %c124 = arith.constant 124 : index
    %c0_9 = arith.constant 0 : index
    %9 = vector.load %arg9[%c124, %c0_9] : memref<144x512xf32, #tpu.memory_space<vmem>>, vector<4x512xf32>
    tpu.vector_store %arg9[%c124, %c0_9], %2 {strides = array<i32>} : memref<144x512xf32, #tpu.memory_space<vmem>>, vector<4x512xf32>,
    %c132 = arith.constant 132 : index
    %c0_10 = arith.constant 0 : index
    %10 = vector.load %arg9[%c132, %c0_10] : memref<144x512xf32, #tpu.memory_space<vmem>>, vector<4x512xf32>
    tpu.vector_store %arg9[%c132, %c0_10], %2 {strides = array<i32>} : memref<144x512xf32, #tpu.memory_space<vmem>>, vector<4x512xf32>,
    %c140 = arith.constant 140 : index
    %c0_11 = arith.constant 0 : index
    %11 = vector.load %arg9[%c140, %c0_11] : memref<144x512xf32, #tpu.memory_space<vmem>>, vector<4x512xf32>
    tpu.vector_store %arg9[%c140, %c0_11], %2 {strides = array<i32>} : memref<144x512xf32, #tpu.memory_space<vmem>>, vector<4x512xf32>,
    %c0_12 = arith.constant 0 : index
    %c0_13 = arith.constant 0 : index
    %12 = vector.load %arg3[%c0_12, %c0_13] : memref<9x512xf32, #tpu.memory_space<vmem>>, vector<1x512xf32>
    %c17_i32 = arith.constant 17 : i32
    %13 = tpu.dynamic_rotate %1 by %c17_i32 dim 1 : vector<8x512xf32>, i32 -> vector<8x512xf32>
    %14 = vector.broadcast %12 : vector<1x512xf32> to vector<8x512xf32>
    %15 = arith.mulf %13, %14 : vector<8x512xf32>
    %c17_i32_14 = arith.constant 17 : i32
    %16 = tpu.dynamic_rotate %0 by %c17_i32_14 dim 1 : vector<4x512xf32>, i32 -> vector<4x512xf32>
    %17 = vector.broadcast %12 : vector<1x512xf32> to vector<4x512xf32>
    %18 = arith.mulf %16, %17 : vector<4x512xf32>
    %c0_15 = arith.constant 0 : index
    %c0_16 = arith.constant 0 : index
    %19 = vector.load %arg9[%c0_15, %c0_16] : memref<144x512xf32, #tpu.memory_space<vmem>>, vector<8x512xf32>
    tpu.vector_store %arg9[%c0_15, %c0_16], %15 {strides = array<i32>} : memref<144x512xf32, #tpu.memory_space<vmem>>, vector<8x512xf32>,
    %c72 = arith.constant 72 : index
    %c0_17 = arith.constant 0 : index
    %20 = vector.load %arg9[%c72, %c0_17] : memref<144x512xf32, #tpu.memory_space<vmem>>, vector<4x512xf32>
    tpu.vector_store %arg9[%c72, %c0_17], %18 {strides = array<i32>} : memref<144x512xf32, #tpu.memory_space<vmem>>, vector<4x512xf32>,
    %c1 = arith.constant 1 : index
    %c0_18 = arith.constant 0 : index
    %21 = vector.load %arg3[%c1, %c0_18] : memref<9x512xf32, #tpu.memory_space<vmem>>, vector<1x512xf32>
    %c16_i32 = arith.constant 16 : i32
    %22 = tpu.dynamic_rotate %1 by %c16_i32 dim 1 : vector<8x512xf32>, i32 -> vector<8x512xf32>
    %23 = vector.broadcast %21 : vector<1x512xf32> to vector<8x512xf32>
    %24 = arith.mulf %22, %23 : vector<8x512xf32>
    %c16_i32_19 = arith.constant 16 : i32
    %25 = tpu.dynamic_rotate %0 by %c16_i32_19 dim 1 : vector<4x512xf32>, i32 -> vector<4x512xf32>
    %26 = vector.broadcast %21 : vector<1x512xf32> to vector<4x512xf32>
    %27 = arith.mulf %25, %26 : vector<4x512xf32>
    %c8 = arith.constant 8 : index
    %c0_20 = arith.constant 0 : index
    %28 = vector.load %arg9[%c8, %c0_20] : memref<144x512xf32, #tpu.memory_space<vmem>>, vector<8x512xf32>
    tpu.vector_store %arg9[%c8, %c0_20], %24 {strides = array<i32>} : memref<144x512xf32, #tpu.memory_space<vmem>>, vector<8x512xf32>,
    %c80 = arith.constant 80 : index
    %c0_21 = arith.constant 0 : index
    %29 = vector.load %arg9[%c80, %c0_21] : memref<144x512xf32, #tpu.memory_space<vmem>>, vector<4x512xf32>
    tpu.vector_store %arg9[%c80, %c0_21], %27 {strides = array<i32>} : memref<144x512xf32, #tpu.memory_space<vmem>>, vector<4x512xf32>,
    %c2 = arith.constant 2 : index
    %c0_22 = arith.constant 0 : index
    %30 = vector.load %arg3[%c2, %c0_22] : memref<9x512xf32, #tpu.memory_space<vmem>>, vector<1x512xf32>
    %c15_i32 = arith.constant 15 : i32
    %31 = tpu.dynamic_rotate %1 by %c15_i32 dim 1 : vector<8x512xf32>, i32 -> vector<8x512xf32>
    %32 = vector.broadcast %30 : vector<1x512xf32> to vector<8x512xf32>
    %33 = arith.mulf %31, %32 : vector<8x512xf32>
    %c15_i32_23 = arith.constant 15 : i32
    %34 = tpu.dynamic_rotate %0 by %c15_i32_23 dim 1 : vector<4x512xf32>, i32 -> vector<4x512xf32>
    %35 = vector.broadcast %30 : vector<1x512xf32> to vector<4x512xf32>
    %36 = arith.mulf %34, %35 : vector<4x512xf32>
    %c16 = arith.constant 16 : index
    %c0_24 = arith.constant 0 : index
    %37 = vector.load %arg9[%c16, %c0_24] : memref<144x512xf32, #tpu.memory_space<vmem>>, vector<8x512xf32>
    tpu.vector_store %arg9[%c16, %c0_24], %33 {strides = array<i32>} : memref<144x512xf32, #tpu.memory_space<vmem>>, vector<8x512xf32>,
    %c88 = arith.constant 88 : index
    %c0_25 = arith.constant 0 : index
    %38 = vector.load %arg9[%c88, %c0_25] : memref<144x512xf32, #tpu.memory_space<vmem>>, vector<4x512xf32>
    tpu.vector_store %arg9[%c88, %c0_25], %36 {strides = array<i32>} : memref<144x512xf32, #tpu.memory_space<vmem>>, vector<4x512xf32>,
    %c3 = arith.constant 3 : index
    %c0_26 = arith.constant 0 : index
    %39 = vector.load %arg3[%c3, %c0_26] : memref<9x512xf32, #tpu.memory_space<vmem>>, vector<1x512xf32>
    %c1_i32 = arith.constant 1 : i32
    %40 = tpu.dynamic_rotate %1 by %c1_i32 dim 1 : vector<8x512xf32>, i32 -> vector<8x512xf32>
    %41 = vector.broadcast %39 : vector<1x512xf32> to vector<8x512xf32>
    %42 = arith.mulf %40, %41 : vector<8x512xf32>
    %c1_i32_27 = arith.constant 1 : i32
    %43 = tpu.dynamic_rotate %0 by %c1_i32_27 dim 1 : vector<4x512xf32>, i32 -> vector<4x512xf32>
    %44 = vector.broadcast %39 : vector<1x512xf32> to vector<4x512xf32>
    %45 = arith.mulf %43, %44 : vector<4x512xf32>
    %c24 = arith.constant 24 : index
    %c0_28 = arith.constant 0 : index
    %46 = vector.load %arg9[%c24, %c0_28] : memref<144x512xf32, #tpu.memory_space<vmem>>, vector<8x512xf32>
    tpu.vector_store %arg9[%c24, %c0_28], %42 {strides = array<i32>} : memref<144x512xf32, #tpu.memory_space<vmem>>, vector<8x512xf32>,
    %c96 = arith.constant 96 : index
    %c0_29 = arith.constant 0 : index
    %47 = vector.load %arg9[%c96, %c0_29] : memref<144x512xf32, #tpu.memory_space<vmem>>, vector<4x512xf32>
    tpu.vector_store %arg9[%c96, %c0_29], %45 {strides = array<i32>} : memref<144x512xf32, #tpu.memory_space<vmem>>, vector<4x512xf32>,
    %c32 = arith.constant 32 : index
    %c0_30 = arith.constant 0 : index
    %48 = vector.load %arg9[%c32, %c0_30] : memref<144x512xf32, #tpu.memory_space<vmem>>, vector<8x512xf32>
    tpu.vector_store %arg9[%c32, %c0_30], %1 {strides = array<i32>} : memref<144x512xf32, #tpu.memory_space<vmem>>, vector<8x512xf32>,
    %c104 = arith.constant 104 : index
    %c0_31 = arith.constant 0 : index
    %49 = vector.load %arg9[%c104, %c0_31] : memref<144x512xf32, #tpu.memory_space<vmem>>, vector<4x512xf32>
    tpu.vector_store %arg9[%c104, %c0_31], %0 {strides = array<i32>} : memref<144x512xf32, #tpu.memory_space<vmem>>, vector<4x512xf32>,
    %c5 = arith.constant 5 : index
    %c0_32 = arith.constant 0 : index
    %50 = vector.load %arg3[%c5, %c0_32] : memref<9x512xf32, #tpu.memory_space<vmem>>, vector<1x512xf32>
    %c511_i32 = arith.constant 511 : i32
    %51 = tpu.dynamic_rotate %1 by %c511_i32 dim 1 : vector<8x512xf32>, i32 -> vector<8x512xf32>
    %52 = vector.broadcast %50 : vector<1x512xf32> to vector<8x512xf32>
    %53 = arith.mulf %51, %52 : vector<8x512xf32>
    %c511_i32_33 = arith.constant 511 : i32
    %54 = tpu.dynamic_rotate %0 by %c511_i32_33 dim 1 : vector<4x512xf32>, i32 -> vector<4x512xf32>
    %55 = vector.broadcast %50 : vector<1x512xf32> to vector<4x512xf32>
    %56 = arith.mulf %54, %55 : vector<4x512xf32>
    %c40 = arith.constant 40 : index
    %c0_34 = arith.constant 0 : index
    %57 = vector.load %arg9[%c40, %c0_34] : memref<144x512xf32, #tpu.memory_space<vmem>>, vector<8x512xf32>
    tpu.vector_store %arg9[%c40, %c0_34], %53 {strides = array<i32>} : memref<144x512xf32, #tpu.memory_space<vmem>>, vector<8x512xf32>,
    %c112 = arith.constant 112 : index
    %c0_35 = arith.constant 0 : index
    %58 = vector.load %arg9[%c112, %c0_35] : memref<144x512xf32, #tpu.memory_space<vmem>>, vector<4x512xf32>
    tpu.vector_store %arg9[%c112, %c0_35], %56 {strides = array<i32>} : memref<144x512xf32, #tpu.memory_space<vmem>>, vector<4x512xf32>,
    %c6 = arith.constant 6 : index
    %c0_36 = arith.constant 0 : index
    %59 = vector.load %arg3[%c6, %c0_36] : memref<9x512xf32, #tpu.memory_space<vmem>>, vector<1x512xf32>
    %c497_i32 = arith.constant 497 : i32
    %60 = tpu.dynamic_rotate %1 by %c497_i32 dim 1 : vector<8x512xf32>, i32 -> vector<8x512xf32>
    %61 = vector.broadcast %59 : vector<1x512xf32> to vector<8x512xf32>
    %62 = arith.mulf %60, %61 : vector<8x512xf32>
    %c497_i32_37 = arith.constant 497 : i32
    %63 = tpu.dynamic_rotate %0 by %c497_i32_37 dim 1 : vector<4x512xf32>, i32 -> vector<4x512xf32>
    %64 = vector.broadcast %59 : vector<1x512xf32> to vector<4x512xf32>
    %65 = arith.mulf %63, %64 : vector<4x512xf32>
    %c48 = arith.constant 48 : index
    %c0_38 = arith.constant 0 : index
    %66 = vector.load %arg9[%c48, %c0_38] : memref<144x512xf32, #tpu.memory_space<vmem>>, vector<8x512xf32>
    tpu.vector_store %arg9[%c48, %c0_38], %62 {strides = array<i32>} : memref<144x512xf32, #tpu.memory_space<vmem>>, vector<8x512xf32>,
    %c120 = arith.constant 120 : index
    %c0_39 = arith.constant 0 : index
    %67 = vector.load %arg9[%c120, %c0_39] : memref<144x512xf32, #tpu.memory_space<vmem>>, vector<4x512xf32>
    tpu.vector_store %arg9[%c120, %c0_39], %65 {strides = array<i32>} : memref<144x512xf32, #tpu.memory_space<vmem>>, vector<4x512xf32>,
    %c7 = arith.constant 7 : index
    %c0_40 = arith.constant 0 : index
    %68 = vector.load %arg3[%c7, %c0_40] : memref<9x512xf32, #tpu.memory_space<vmem>>, vector<1x512xf32>
    %c496_i32 = arith.constant 496 : i32
    %69 = tpu.dynamic_rotate %1 by %c496_i32 dim 1 : vector<8x512xf32>, i32 -> vector<8x512xf32>
    %70 = vector.broadcast %68 : vector<1x512xf32> to vector<8x512xf32>
    %71 = arith.mulf %69, %70 : vector<8x512xf32>
    %c496_i32_41 = arith.constant 496 : i32
    %72 = tpu.dynamic_rotate %0 by %c496_i32_41 dim 1 : vector<4x512xf32>, i32 -> vector<4x512xf32>
    %73 = vector.broadcast %68 : vector<1x512xf32> to vector<4x512xf32>
    %74 = arith.mulf %72, %73 : vector<4x512xf32>
    %c56 = arith.constant 56 : index
    %c0_42 = arith.constant 0 : index
    %75 = vector.load %arg9[%c56, %c0_42] : memref<144x512xf32, #tpu.memory_space<vmem>>, vector<8x512xf32>
    tpu.vector_store %arg9[%c56, %c0_42], %71 {strides = array<i32>} : memref<144x512xf32, #tpu.memory_space<vmem>>, vector<8x512xf32>,
    %c128 = arith.constant 128 : index
    %c0_43 = arith.constant 0 : index
    %76 = vector.load %arg9[%c128, %c0_43] : memref<144x512xf32, #tpu.memory_space<vmem>>, vector<4x512xf32>
    tpu.vector_store %arg9[%c128, %c0_43], %74 {strides = array<i32>} : memref<144x512xf32, #tpu.memory_space<vmem>>, vector<4x512xf32>,
    %c8_44 = arith.constant 8 : index
    %c0_45 = arith.constant 0 : index
    %77 = vector.load %arg3[%c8_44, %c0_45] : memref<9x512xf32, #tpu.memory_space<vmem>>, vector<1x512xf32>
    %c495_i32 = arith.constant 495 : i32
    %78 = tpu.dynamic_rotate %1 by %c495_i32 dim 1 : vector<8x512xf32>, i32 -> vector<8x512xf32>
    %79 = vector.broadcast %77 : vector<1x512xf32> to vector<8x512xf32>
    %80 = arith.mulf %78, %79 : vector<8x512xf32>
    %c495_i32_46 = arith.constant 495 : i32
    %81 = tpu.dynamic_rotate %0 by %c495_i32_46 dim 1 : vector<4x512xf32>, i32 -> vector<4x512xf32>
    %82 = vector.broadcast %77 : vector<1x512xf32> to vector<4x512xf32>
    %83 = arith.mulf %81, %82 : vector<4x512xf32>
    %c64 = arith.constant 64 : index
    %c0_47 = arith.constant 0 : index
    %84 = vector.load %arg9[%c64, %c0_47] : memref<144x512xf32, #tpu.memory_space<vmem>>, vector<8x512xf32>
    tpu.vector_store %arg9[%c64, %c0_47], %80 {strides = array<i32>} : memref<144x512xf32, #tpu.memory_space<vmem>>, vector<8x512xf32>,
    %c136 = arith.constant 136 : index
    %c0_48 = arith.constant 0 : index
    %85 = vector.load %arg9[%c136, %c0_48] : memref<144x512xf32, #tpu.memory_space<vmem>>, vector<4x512xf32>
    tpu.vector_store %arg9[%c136, %c0_48], %83 {strides = array<i32>} : memref<144x512xf32, #tpu.memory_space<vmem>>, vector<4x512xf32>,
    %c0_49 = arith.constant 0 : index
    %c0_50 = arith.constant 0 : index
    %86 = vector.load %arg4[%c0_49, %c0_50] : memref<16x144xf32, #tpu.memory_space<vmem>>, vector<16x144xf32>
    %c0_51 = arith.constant 0 : index
    %c0_52 = arith.constant 0 : index
    %87 = vector.load %arg9[%c0_51, %c0_52] : memref<144x512xf32, #tpu.memory_space<vmem>>, vector<144x512xf32>
    %cst_53 = arith.constant dense<0.000000e+00> : vector<16x512xf32>
    %88 = tpu.matmul %86, %87, %cst_53 {dimension_numbers = #tpu.dot_dimension_numbers<[1], [0], [0], [1], [0, 0, 1, 1], [], []>} : vector<16x144xf32>, vector<144x512xf32>, vector<16x512xf32> -> vector<16x512xf32>
    %c0_54 = arith.constant 0 : index
    %c0_55 = arith.constant 0 : index
    %89 = vector.load %arg5[%c0_54, %c0_55] : memref<16x1xf32, #tpu.memory_space<vmem>>, vector<16x1xf32>
    %90 = vector.broadcast %89 : vector<16x1xf32> to vector<16x512xf32>
    %91 = arith.addf %88, %90 : vector<16x512xf32>
    %92 = vector.extract_strided_slice %91 {offsets = [0, 0], sizes = [8, 512], strides = [1, 1]} : vector<16x512xf32> to vector<8x512xf32>
    %93 = arith.negf %92 : vector<8x512xf32>
    %94 = math.exp %93 : vector<8x512xf32>
    %cst_56 = arith.constant 1.000000e+00 : f32
    %95 = vector.broadcast %cst_56 : f32 to vector<8x512xf32>
    %96 = arith.addf %95, %94 : vector<8x512xf32>
    %97 = arith.divf %95, %96 : vector<8x512xf32>
    %98 = vector.extract_strided_slice %91 {offsets = [8, 0], sizes = [8, 512], strides = [1, 1]} : vector<16x512xf32> to vector<8x512xf32>
    %99 = arith.negf %98 : vector<8x512xf32>
    %100 = math.exp %99 : vector<8x512xf32>
    %cst_57 = arith.constant 1.000000e+00 : f32
    %101 = vector.broadcast %cst_57 : f32 to vector<8x512xf32>
    %102 = arith.addf %101, %100 : vector<8x512xf32>
    %103 = arith.divf %101, %102 : vector<8x512xf32>
    %c17_i32_58 = arith.constant 17 : i32
    %104 = tpu.dynamic_rotate %97 by %c17_i32_58 dim 1 : vector<8x512xf32>, i32 -> vector<8x512xf32>
    %c0_59 = arith.constant 0 : index
    %c0_60 = arith.constant 0 : index
    %105 = vector.load %arg9[%c0_59, %c0_60] : memref<144x512xf32, #tpu.memory_space<vmem>>, vector<8x512xf32>
    %106 = arith.mulf %105, %104 : vector<8x512xf32>
    %c0_61 = arith.constant 0 : index
    %c0_62 = arith.constant 0 : index
    %107 = vector.load %arg9[%c0_61, %c0_62] : memref<144x512xf32, #tpu.memory_space<vmem>>, vector<8x512xf32>
    tpu.vector_store %arg9[%c0_61, %c0_62], %106 {strides = array<i32>} : memref<144x512xf32, #tpu.memory_space<vmem>>, vector<8x512xf32>,
    %c16_i32_63 = arith.constant 16 : i32
    %108 = tpu.dynamic_rotate %97 by %c16_i32_63 dim 1 : vector<8x512xf32>, i32 -> vector<8x512xf32>
    %c8_64 = arith.constant 8 : index
    %c0_65 = arith.constant 0 : index
    %109 = vector.load %arg9[%c8_64, %c0_65] : memref<144x512xf32, #tpu.memory_space<vmem>>, vector<8x512xf32>
    %110 = arith.mulf %109, %108 : vector<8x512xf32>
    %c8_66 = arith.constant 8 : index
    %c0_67 = arith.constant 0 : index
    %111 = vector.load %arg9[%c8_66, %c0_67] : memref<144x512xf32, #tpu.memory_space<vmem>>, vector<8x512xf32>
    tpu.vector_store %arg9[%c8_66, %c0_67], %110 {strides = array<i32>} : memref<144x512xf32, #tpu.memory_space<vmem>>, vector<8x512xf32>,
    %c15_i32_68 = arith.constant 15 : i32
    %112 = tpu.dynamic_rotate %97 by %c15_i32_68 dim 1 : vector<8x512xf32>, i32 -> vector<8x512xf32>
    %c16_69 = arith.constant 16 : index
    %c0_70 = arith.constant 0 : index
    %113 = vector.load %arg9[%c16_69, %c0_70] : memref<144x512xf32, #tpu.memory_space<vmem>>, vector<8x512xf32>
    %114 = arith.mulf %113, %112 : vector<8x512xf32>
    %c16_71 = arith.constant 16 : index
    %c0_72 = arith.constant 0 : index
    %115 = vector.load %arg9[%c16_71, %c0_72] : memref<144x512xf32, #tpu.memory_space<vmem>>, vector<8x512xf32>
    tpu.vector_store %arg9[%c16_71, %c0_72], %114 {strides = array<i32>} : memref<144x512xf32, #tpu.memory_space<vmem>>, vector<8x512xf32>,
    %c1_i32_73 = arith.constant 1 : i32
    %116 = tpu.dynamic_rotate %97 by %c1_i32_73 dim 1 : vector<8x512xf32>, i32 -> vector<8x512xf32>
    %c24_74 = arith.constant 24 : index
    %c0_75 = arith.constant 0 : index
    %117 = vector.load %arg9[%c24_74, %c0_75] : memref<144x512xf32, #tpu.memory_space<vmem>>, vector<8x512xf32>
    %118 = arith.mulf %117, %116 : vector<8x512xf32>
    %c24_76 = arith.constant 24 : index
    %c0_77 = arith.constant 0 : index
    %119 = vector.load %arg9[%c24_76, %c0_77] : memref<144x512xf32, #tpu.memory_space<vmem>>, vector<8x512xf32>
    tpu.vector_store %arg9[%c24_76, %c0_77], %118 {strides = array<i32>} : memref<144x512xf32, #tpu.memory_space<vmem>>, vector<8x512xf32>,
    %c32_78 = arith.constant 32 : index
    %c0_79 = arith.constant 0 : index
    %120 = vector.load %arg9[%c32_78, %c0_79] : memref<144x512xf32, #tpu.memory_space<vmem>>, vector<8x512xf32>
    %121 = arith.mulf %120, %97 : vector<8x512xf32>
    %c32_80 = arith.constant 32 : index
    %c0_81 = arith.constant 0 : index
    %122 = vector.load %arg9[%c32_80, %c0_81] : memref<144x512xf32, #tpu.memory_space<vmem>>, vector<8x512xf32>
    tpu.vector_store %arg9[%c32_80, %c0_81], %121 {strides = array<i32>} : memref<144x512xf32, #tpu.memory_space<vmem>>, vector<8x512xf32>,
    %c511_i32_82 = arith.constant 511 : i32
    %123 = tpu.dynamic_rotate %97 by %c511_i32_82 dim 1 : vector<8x512xf32>, i32 -> vector<8x512xf32>
    %c40_83 = arith.constant 40 : index
    %c0_84 = arith.constant 0 : index
    %124 = vector.load %arg9[%c40_83, %c0_84] : memref<144x512xf32, #tpu.memory_space<vmem>>, vector<8x512xf32>
    %125 = arith.mulf %124, %123 : vector<8x512xf32>
    %c40_85 = arith.constant 40 : index
    %c0_86 = arith.constant 0 : index
    %126 = vector.load %arg9[%c40_85, %c0_86] : memref<144x512xf32, #tpu.memory_space<vmem>>, vector<8x512xf32>
    tpu.vector_store %arg9[%c40_85, %c0_86], %125 {strides = array<i32>} : memref<144x512xf32, #tpu.memory_space<vmem>>, vector<8x512xf32>,
    %c497_i32_87 = arith.constant 497 : i32
    %127 = tpu.dynamic_rotate %97 by %c497_i32_87 dim 1 : vector<8x512xf32>, i32 -> vector<8x512xf32>
    %c48_88 = arith.constant 48 : index
    %c0_89 = arith.constant 0 : index
    %128 = vector.load %arg9[%c48_88, %c0_89] : memref<144x512xf32, #tpu.memory_space<vmem>>, vector<8x512xf32>
    %129 = arith.mulf %128, %127 : vector<8x512xf32>
    %c48_90 = arith.constant 48 : index
    %c0_91 = arith.constant 0 : index
    %130 = vector.load %arg9[%c48_90, %c0_91] : memref<144x512xf32, #tpu.memory_space<vmem>>, vector<8x512xf32>
    tpu.vector_store %arg9[%c48_90, %c0_91], %129 {strides = array<i32>} : memref<144x512xf32, #tpu.memory_space<vmem>>, vector<8x512xf32>,
    %c496_i32_92 = arith.constant 496 : i32
    %131 = tpu.dynamic_rotate %97 by %c496_i32_92 dim 1 : vector<8x512xf32>, i32 -> vector<8x512xf32>
    %c56_93 = arith.constant 56 : index
    %c0_94 = arith.constant 0 : index
    %132 = vector.load %arg9[%c56_93, %c0_94] : memref<144x512xf32, #tpu.memory_space<vmem>>, vector<8x512xf32>
    %133 = arith.mulf %132, %131 : vector<8x512xf32>
    %c56_95 = arith.constant 56 : index
    %c0_96 = arith.constant 0 : index
    %134 = vector.load %arg9[%c56_95, %c0_96] : memref<144x512xf32, #tpu.memory_space<vmem>>, vector<8x512xf32>
    tpu.vector_store %arg9[%c56_95, %c0_96], %133 {strides = array<i32>} : memref<144x512xf32, #tpu.memory_space<vmem>>, vector<8x512xf32>,
    %c495_i32_97 = arith.constant 495 : i32
    %135 = tpu.dynamic_rotate %97 by %c495_i32_97 dim 1 : vector<8x512xf32>, i32 -> vector<8x512xf32>
    %c64_98 = arith.constant 64 : index
    %c0_99 = arith.constant 0 : index
    %136 = vector.load %arg9[%c64_98, %c0_99] : memref<144x512xf32, #tpu.memory_space<vmem>>, vector<8x512xf32>
    %137 = arith.mulf %136, %135 : vector<8x512xf32>
    %c64_100 = arith.constant 64 : index
    %c0_101 = arith.constant 0 : index
    %138 = vector.load %arg9[%c64_100, %c0_101] : memref<144x512xf32, #tpu.memory_space<vmem>>, vector<8x512xf32>
    tpu.vector_store %arg9[%c64_100, %c0_101], %137 {strides = array<i32>} : memref<144x512xf32, #tpu.memory_space<vmem>>, vector<8x512xf32>,
    %c0_102 = arith.constant 0 : index
    %c0_103 = arith.constant 0 : index
    %139 = vector.load %arg6[%c0_102, %c0_103] : memref<8x144xf32, #tpu.memory_space<vmem>>, vector<8x144xf32>
    %c0_104 = arith.constant 0 : index
    %c0_105 = arith.constant 0 : index
    %140 = vector.load %arg9[%c0_104, %c0_105] : memref<144x512xf32, #tpu.memory_space<vmem>>, vector<144x512xf32>
    %cst_106 = arith.constant dense<0.000000e+00> : vector<8x512xf32>
    %141 = tpu.matmul %139, %140, %cst_106 {dimension_numbers = #tpu.dot_dimension_numbers<[1], [0], [0], [1], [0, 0, 1, 1], [], []>} : vector<8x144xf32>, vector<144x512xf32>, vector<8x512xf32> -> vector<8x512xf32>
    %c0_107 = arith.constant 0 : index
    %c0_108 = arith.constant 0 : index
    %142 = vector.load %arg7[%c0_107, %c0_108] : memref<8x1xf32, #tpu.memory_space<vmem>>, vector<8x1xf32>
    %143 = vector.broadcast %142 : vector<8x1xf32> to vector<8x512xf32>
    %144 = arith.addf %141, %143 : vector<8x512xf32>
    %145 = math.tanh %144 : vector<8x512xf32>
    %cst_109 = arith.constant 1.000000e+00 : f32
    %146 = vector.broadcast %cst_109 : f32 to vector<8x512xf32>
    %147 = arith.subf %146, %103 : vector<8x512xf32>
    %148 = arith.mulf %147, %1 : vector<8x512xf32>
    %149 = arith.mulf %103, %145 : vector<8x512xf32>
    %150 = arith.addf %148, %149 : vector<8x512xf32>
    %c0_110 = arith.constant 0 : index
    %c0_111 = arith.constant 0 : index
    %151 = vector.load %arg8[%c0_110, %c0_111] : memref<8x512xf32, #tpu.memory_space<vmem>>, vector<8x512xf32>
    tpu.vector_store %arg8[%c0_110, %c0_111], %150 {strides = array<i32>} : memref<8x512xf32, #tpu.memory_space<vmem>>, vector<8x512xf32>,
    return
  }
  func.func @transform_0(%arg0: i32) -> (i32, i32) {
    %c0_i32 = arith.constant 0 : i32
    %c0_i32_0 = arith.constant 0 : i32
    %c0_i32_1 = arith.constant 0 : i32
    return %c0_i32, %c0_i32_0 : i32, i32
  }
  func.func @transform_1(%arg0: i32) -> (i32, i32) {
    %c0_i32 = arith.constant 0 : i32
    %c0_i32_0 = arith.constant 0 : i32
    %c0_i32_1 = arith.constant 0 : i32
    return %c0_i32, %c0_i32_0 : i32, i32
  }
  func.func @transform_2(%arg0: i32) -> (i32, i32) {
    %c0_i32 = arith.constant 0 : i32
    %c0_i32_0 = arith.constant 0 : i32
    %c0_i32_1 = arith.constant 0 : i32
    return %c0_i32, %c0_i32_0 : i32, i32
  }
  func.func @transform_3(%arg0: i32) -> (i32, i32) {
    %c0_i32 = arith.constant 0 : i32
    %c0_i32_0 = arith.constant 0 : i32
    %c0_i32_1 = arith.constant 0 : i32
    return %c0_i32, %c0_i32_0 : i32, i32
  }
  func.func @transform_4(%arg0: i32) -> (i32, i32) {
    %c0_i32 = arith.constant 0 : i32
    %c0_i32_0 = arith.constant 0 : i32
    %c0_i32_1 = arith.constant 0 : i32
    return %c0_i32, %c0_i32_0 : i32, i32
  }
  func.func @transform_5(%arg0: i32) -> (i32, i32) {
    %c0_i32 = arith.constant 0 : i32
    %c0_i32_0 = arith.constant 0 : i32
    %c0_i32_1 = arith.constant 0 : i32
    return %c0_i32, %c0_i32_0 : i32, i32
  }
  func.func @transform_6(%arg0: i32) -> (i32, i32) {
    %c0_i32 = arith.constant 0 : i32
    %c0_i32_0 = arith.constant 0 : i32
    %c0_i32_1 = arith.constant 0 : i32
    return %c0_i32, %c0_i32_0 : i32, i32
  }
  func.func @transform_7(%arg0: i32) -> (i32, i32) {
    %c0_i32 = arith.constant 0 : i32
    %c0_i32_0 = arith.constant 0 : i32
    %c0_i32_1 = arith.constant 0 : i32
    return %c0_i32, %c0_i32_0 : i32, i32
  }
}

</mosaic_0001>

<llo_original>
// kernel: conv_gru_cell_pallas.1
$region0: #{conv_gru_cell_pallas.1}
  #allocation0 [shape = 'u32[]', space=smem, size = 0x4, offset = 0x4, fixed_abs, tag = 'smem constant byte address 0x4 - core index']
  #allocation1 [shape = 'u32[144,128]{1,0:T(1,128)}', space=vmem, size = 0x12000, scoped, tag = 'internal scratch']
  #allocation2 [shape = 'f32[144,512]{1,0:T(8,128)}', space=vmem, size = 0x48000, scoped, tag = 'scratch operand']
  %s0 = inlined_call_operand.vmem [shape: f32[4,512], index: 0, kind: input, shape index: {}]
  %s1 = inlined_call_operand.vmem [shape: f32[8,512], index: 1, kind: input, shape index: {}]
  %s2 = inlined_call_operand.vmem [shape: f32[9,512], index: 2, kind: input, shape index: {}]
  %s3 = inlined_call_operand.vmem [shape: f32[16,144], index: 3, kind: input, shape index: {}]
  %s4 = inlined_call_operand.vmem [shape: f32[16,1], index: 4, kind: input, shape index: {}]
  %s5 = inlined_call_operand.vmem [shape: f32[8,144], index: 5, kind: input, shape index: {}]
  %s6 = inlined_call_operand.vmem [shape: f32[8,1], index: 6, kind: input, shape index: {}]
  %s7 = inlined_call_operand.vmem [shape: f32[8,512], index: 7, kind: output, shape index: {}]
  %s8 = sld [smem:[#allocation0]]
  $region38: #{conv_gru_cell_pallas.1} parent=0
    _
  %s10 = ssub.s32 1, %s8
  %s11 = scalar_select 0, %s10, %s8
  // Predicated region
  $region2: #{conv_gru_cell_pallas.1} parent=0 // pred_check
    _
  $region3: #{conv_gru_cell_pallas.1} parent=0 // pred_check_branch
    %13 = sbr.rel (0) target = $region5
  $region4: #{conv_gru_cell_pallas.1} parent=0 // pred_region
    _
  $region5: #{conv_gru_cell_pallas.1} parent=0 // pred_fallthru
    _
  // Predicated region
  $region6: #{conv_gru_cell_pallas.1} parent=0 // pred_check
    _
  $region7: #{conv_gru_cell_pallas.1} parent=0 // pred_check_branch
    %15 = sbr.rel (0) target = $region9
  $region8: #{conv_gru_cell_pallas.1} parent=0 // pred_region
    _
  $region9: #{conv_gru_cell_pallas.1} parent=0 // pred_fallthru
    _
  // Predicated region
  $region10: #{conv_gru_cell_pallas.1} parent=0 // pred_check
    _
  $region11: #{conv_gru_cell_pallas.1} parent=0 // pred_check_branch
    %17 = sbr.rel (0) target = $region13
  $region12: #{conv_gru_cell_pallas.1} parent=0 // pred_region
    _
  $region13: #{conv_gru_cell_pallas.1} parent=0 // pred_fallthru
    _
  // Predicated region
  $region14: #{conv_gru_cell_pallas.1} parent=0 // pred_check
    _
  $region15: #{conv_gru_cell_pallas.1} parent=0 // pred_check_branch
    %19 = sbr.rel (0) target = $region17
  $region16: #{conv_gru_cell_pallas.1} parent=0 // pred_region
    _
  $region17: #{conv_gru_cell_pallas.1} parent=0 // pred_fallthru
    _
  // Predicated region
  $region18: #{conv_gru_cell_pallas.1} parent=0 // pred_check
    _
  $region19: #{conv_gru_cell_pallas.1} parent=0 // pred_check_branch
    %21 = sbr.rel (0) target = $region21
  $region20: #{conv_gru_cell_pallas.1} parent=0 // pred_region
    _
  $region21: #{conv_gru_cell_pallas.1} parent=0 // pred_fallthru
    _
  // Predicated region
  $region22: #{conv_gru_cell_pallas.1} parent=0 // pred_check
    _
  $region23: #{conv_gru_cell_pallas.1} parent=0 // pred_check_branch
    %23 = sbr.rel (0) target = $region25
  $region24: #{conv_gru_cell_pallas.1} parent=0 // pred_region
    _
  $region25: #{conv_gru_cell_pallas.1} parent=0 // pred_fallthru
    _
  // Predicated region
  $region26: #{conv_gru_cell_pallas.1} parent=0 // pred_check
    _
  $region27: #{conv_gru_cell_pallas.1} parent=0 // pred_check_branch
    %25 = sbr.rel (0) target = $region29
  $region28: #{conv_gru_cell_pallas.1} parent=0 // pred_region
    _
  $region29: #{conv_gru_cell_pallas.1} parent=0 // pred_fallthru
    _
  %v26 = vld [vmem:[%s0] sm:$0xff]
  %v27 = vld [vmem:[%s0 + $0x8] sm:$0xff]
  %v28 = vld [vmem:[%s1] sm:$0xff]
  %v29 = vld [vmem:[%s1 + $0x8] sm:$0xff]
  %v30 = vld [vmem:[%s1 + $0x10] sm:$0xff]
  %v31 = vld [vmem:[%s1 + $0x18] sm:$0xff]
  %32 = vst [vmem:[#allocation2 + $0x120] sm:$0xf0] 0.0
  %33 = vst [vmem:[#allocation2 + $0x128] sm:$0xf0] 0.0
  %34 = vst [vmem:[#allocation2 + $0x130] sm:$0xf0] 0.0
  %35 = vst [vmem:[#allocation2 + $0x138] sm:$0xf0] 0.0
  %36 = vst [vmem:[#allocation2 + $0x140] sm:$0xf0] 0.0
  %37 = vst [vmem:[#allocation2 + $0x148] sm:$0xf0] 0.0
  %38 = vst [vmem:[#allocation2 + $0x150] sm:$0xf0] 0.0
  %39 = vst [vmem:[#allocation2 + $0x158] sm:$0xf0] 0.0
  %40 = vst [vmem:[#allocation2 + $0x160] sm:$0xf0] 0.0
  %41 = vst [vmem:[#allocation2 + $0x168] sm:$0xf0] 0.0
  %42 = vst [vmem:[#allocation2 + $0x170] sm:$0xf0] 0.0
  %43 = vst [vmem:[#allocation2 + $0x178] sm:$0xf0] 0.0
  %44 = vst [vmem:[#allocation2 + $0x180] sm:$0xf0] 0.0
  %45 = vst [vmem:[#allocation2 + $0x188] sm:$0xf0] 0.0
  %46 = vst [vmem:[#allocation2 + $0x190] sm:$0xf0] 0.0
  %47 = vst [vmem:[#allocation2 + $0x198] sm:$0xf0] 0.0
  %48 = vst [vmem:[#allocation2 + $0x1a0] sm:$0xf0] 0.0
  %49 = vst [vmem:[#allocation2 + $0x1a8] sm:$0xf0] 0.0
  %50 = vst [vmem:[#allocation2 + $0x1b0] sm:$0xf0] 0.0
  %51 = vst [vmem:[#allocation2 + $0x1b8] sm:$0xf0] 0.0
  %52 = vst [vmem:[#allocation2 + $0x1c0] sm:$0xf0] 0.0
  %53 = vst [vmem:[#allocation2 + $0x1c8] sm:$0xf0] 0.0
  %54 = vst [vmem:[#allocation2 + $0x1d0] sm:$0xf0] 0.0
  %55 = vst [vmem:[#allocation2 + $0x1d8] sm:$0xf0] 0.0
  %56 = vst [vmem:[#allocation2 + $0x1e0] sm:$0xf0] 0.0
  %57 = vst [vmem:[#allocation2 + $0x1e8] sm:$0xf0] 0.0
  %58 = vst [vmem:[#allocation2 + $0x1f0] sm:$0xf0] 0.0
  %59 = vst [vmem:[#allocation2 + $0x1f8] sm:$0xf0] 0.0
  %60 = vst [vmem:[#allocation2 + $0x200] sm:$0xf0] 0.0
  %61 = vst [vmem:[#allocation2 + $0x208] sm:$0xf0] 0.0
  %62 = vst [vmem:[#allocation2 + $0x210] sm:$0xf0] 0.0
  %63 = vst [vmem:[#allocation2 + $0x218] sm:$0xf0] 0.0
  %64 = vst [vmem:[#allocation2 + $0x220] sm:$0xf0] 0.0
  %65 = vst [vmem:[#allocation2 + $0x228] sm:$0xf0] 0.0
  %66 = vst [vmem:[#allocation2 + $0x230] sm:$0xf0] 0.0
  %67 = vst [vmem:[#allocation2 + $0x238] sm:$0xf0] 0.0
  %v68 = vld [vmem:[%s2] ss:$8 sm:$0xf]
  %69 = vrot.lane.b32.xlu0 %v28, 17
  %v70 = vpop.permute.xlu0 %69
  %71 = vrot.lane.b32.xlu0 %v29, 17
  %v72 = vpop.permute.xlu0 %71
  %73 = vrot.lane.b32.xlu0 %v30, 17
  %v74 = vpop.permute.xlu0 %73
  %75 = vrot.lane.b32.xlu0 %v31, 17
  %v76 = vpop.permute.xlu0 %75
  %v77 = vlaneseq
  %v78 = vand.u32 %v77, 127
  %vm79 = vcmp.lt.s32.totalorder %v78, 17
  %v80 = vsel %vm79, %v74, %v76
  %v81 = vsel %vm79, %v72, %v74
  %v82 = vsel %vm79, %v70, %v72
  %v83 = vsel %vm79, %v76, %v70
  %v85 = vlaneseq
  %v86 = vshrl.u32 %v85, 7
  %v87 = vsub.s32 0, %v86
  %v88 = vrot.slane %v68, %v87
  %v89 = vlaneseq
  %v90 = vshrl.u32 %v89, 7
  %v91 = vsub.s32 1, %v90
  %v92 = vrot.slane %v68, %v91
  %v93 = vlaneseq
  %v94 = vshrl.u32 %v93, 7
  %v95 = vsub.s32 2, %v94
  %v96 = vrot.slane %v68, %v95
  %v97 = vlaneseq
  %v98 = vshrl.u32 %v97, 7
  %v99 = vsub.s32 3, %v98
  %v100 = vrot.slane %v68, %v99
  %v105 = vmul.f32 %v83, %v88
  %v106 = vmul.f32 %v82, %v92
  %v107 = vmul.f32 %v81, %v96
  %v108 = vmul.f32 %v80, %v100
  %v111 = vcombine.high %v26, %v26
  %v112 = vcombine.high %v27, %v27
  %115 = vrot.lane.b32.xlu0 %v26, 17
  %v116 = vpop.permute.xlu0 %115
  %117 = vrot.lane.b32.xlu0 %v111, 17
  %v118 = vpop.permute.xlu0 %117
  %119 = vrot.lane.b32.xlu0 %v27, 17
  %v120 = vpop.permute.xlu0 %119
  %121 = vrot.lane.b32.xlu0 %v112, 17
  %v122 = vpop.permute.xlu0 %121
  %v123 = vsel %vm79, %v120, %v122
  %v124 = vsel %vm79, %v118, %v120
  %v125 = vsel %vm79, %v116, %v118
  %v126 = vsel %vm79, %v122, %v116
  %v127 = vmul.f32 %v126, %v88
  %v128 = vmul.f32 %v125, %v92
  %v129 = vmul.f32 %v124, %v96
  %v130 = vmul.f32 %v123, %v100
  %131 = vst [vmem:[#allocation2] sm:$0xff] %v105
  %132 = vst [vmem:[#allocation2 + $0x8] sm:$0xff] %v106
  %133 = vst [vmem:[#allocation2 + $0x10] sm:$0xff] %v107
  %134 = vst [vmem:[#allocation2 + $0x18] sm:$0xff] %v108
  %135 = vst [vmem:[#allocation2 + $0x120] sm:$0xf] %v127
  %136 = vst [vmem:[#allocation2 + $0x128] sm:$0xf] %v128
  %137 = vst [vmem:[#allocation2 + $0x130] sm:$0xf] %v129
  %138 = vst [vmem:[#allocation2 + $0x138] sm:$0xf] %v130
  %s139 = scalar_lea.vmem %s2, 1
  %v140 = vld [vmem:[%s139] ss:$8 sm:$0xf]
  %141 = vrot.lane.b32.xlu0 %v28, 16
  %v142 = vpop.permute.xlu0 %141
  %143 = vrot.lane.b32.xlu0 %v29, 16
  %v144 = vpop.permute.xlu0 %143
  %145 = vrot.lane.b32.xlu0 %v30, 16
  %v146 = vpop.permute.xlu0 %145
  %147 = vrot.lane.b32.xlu0 %v31, 16
  %v148 = vpop.permute.xlu0 %147
  %vm149 = vcmp.lt.s32.totalorder %v78, 16
  %v150 = vsel %vm149, %v146, %v148
  %v151 = vsel %vm149, %v144, %v146
  %v152 = vsel %vm149, %v142, %v144
  %v153 = vsel %vm149, %v148, %v142
  %v155 = vlaneseq
  %v156 = vshrl.u32 %v155, 7
  %v157 = vsub.s32 0, %v156
  %v158 = vrot.slane %v140, %v157
  %v159 = vlaneseq
  %v160 = vshrl.u32 %v159, 7
  %v161 = vsub.s32 1, %v160
  %v162 = vrot.slane %v140, %v161
  %v163 = vlaneseq
  %v164 = vshrl.u32 %v163, 7
  %v165 = vsub.s32 2, %v164
  %v166 = vrot.slane %v140, %v165
  %v167 = vlaneseq
  %v168 = vshrl.u32 %v167, 7
  %v169 = vsub.s32 3, %v168
  %v170 = vrot.slane %v140, %v169
  %v175 = vmul.f32 %v153, %v158
  %v176 = vmul.f32 %v152, %v162
  %v177 = vmul.f32 %v151, %v166
  %v178 = vmul.f32 %v150, %v170
  %179 = vrot.lane.b32.xlu0 %v26, 16
  %v180 = vpop.permute.xlu0 %179
  %181 = vrot.lane.b32.xlu0 %v111, 16
  %v182 = vpop.permute.xlu0 %181
  %183 = vrot.lane.b32.xlu0 %v27, 16
  %v184 = vpop.permute.xlu0 %183
  %185 = vrot.lane.b32.xlu0 %v112, 16
  %v186 = vpop.permute.xlu0 %185
  %v187 = vsel %vm149, %v184, %v186
  %v188 = vsel %vm149, %v182, %v184
  %v189 = vsel %vm149, %v180, %v182
  %v190 = vsel %vm149, %v186, %v180
  %v191 = vmul.f32 %v190, %v158
  %v192 = vmul.f32 %v189, %v162
  %v193 = vmul.f32 %v188, %v166
  %v194 = vmul.f32 %v187, %v170
  %195 = vst [vmem:[#allocation2 + $0x20] sm:$0xff] %v175
  %196 = vst [vmem:[#allocation2 + $0x28] sm:$0xff] %v176
  %197 = vst [vmem:[#allocation2 + $0x30] sm:$0xff] %v177
  %198 = vst [vmem:[#allocation2 + $0x38] sm:$0xff] %v178
  %199 = vst [vmem:[#allocation2 + $0x140] sm:$0xf] %v191
  %200 = vst [vmem:[#allocation2 + $0x148] sm:$0xf] %v192
  %201 = vst [vmem:[#allocation2 + $0x150] sm:$0xf] %v193
  %202 = vst [vmem:[#allocation2 + $0x158] sm:$0xf] %v194
  %s203 = scalar_lea.vmem %s2, 2
  %v204 = vld [vmem:[%s203] ss:$8 sm:$0xf]
  %205 = vrot.lane.b32.xlu0 %v28, 15
  %v206 = vpop.permute.xlu0 %205
  %207 = vrot.lane.b32.xlu0 %v29, 15
  %v208 = vpop.permute.xlu0 %207
  %209 = vrot.lane.b32.xlu0 %v30, 15
  %v210 = vpop.permute.xlu0 %209
  %211 = vrot.lane.b32.xlu0 %v31, 15
  %v212 = vpop.permute.xlu0 %211
  %vm213 = vcmp.lt.s32.totalorder %v78, 15
  %v214 = vsel %vm213, %v210, %v212
  %v215 = vsel %vm213, %v208, %v210
  %v216 = vsel %vm213, %v206, %v208
  %v217 = vsel %vm213, %v212, %v206
  %v219 = vlaneseq
  %v220 = vshrl.u32 %v219, 7
  %v221 = vsub.s32 0, %v220
  %v222 = vrot.slane %v204, %v221
  %v223 = vlaneseq
  %v224 = vshrl.u32 %v223, 7
  %v225 = vsub.s32 1, %v224
  %v226 = vrot.slane %v204, %v225
  %v227 = vlaneseq
  %v228 = vshrl.u32 %v227, 7
  %v229 = vsub.s32 2, %v228
  %v230 = vrot.slane %v204, %v229
  %v231 = vlaneseq
  %v232 = vshrl.u32 %v231, 7
  %v233 = vsub.s32 3, %v232
  %v234 = vrot.slane %v204, %v233
  %v239 = vmul.f32 %v217, %v222
  %v240 = vmul.f32 %v216, %v226
  %v241 = vmul.f32 %v215, %v230
  %v242 = vmul.f32 %v214, %v234
  %243 = vrot.lane.b32.xlu0 %v26, 15
  %v244 = vpop.permute.xlu0 %243
  %245 = vrot.lane.b32.xlu0 %v111, 15
  %v246 = vpop.permute.xlu0 %245
  %247 = vrot.lane.b32.xlu0 %v27, 15
  %v248 = vpop.permute.xlu0 %247
  %249 = vrot.lane.b32.xlu0 %v112, 15
  %v250 = vpop.permute.xlu0 %249
  %v251 = vsel %vm213, %v248, %v250
  %v252 = vsel %vm213, %v246, %v248
  %v253 = vsel %vm213, %v244, %v246
  %v254 = vsel %vm213, %v250, %v244
  %v255 = vmul.f32 %v254, %v222
  %v256 = vmul.f32 %v253, %v226
  %v257 = vmul.f32 %v252, %v230
  %v258 = vmul.f32 %v251, %v234
  %259 = vst [vmem:[#allocation2 + $0x40] sm:$0xff] %v239
  %260 = vst [vmem:[#allocation2 + $0x48] sm:$0xff] %v240
  %261 = vst [vmem:[#allocation2 + $0x50] sm:$0xff] %v241
  %262 = vst [vmem:[#allocation2 + $0x58] sm:$0xff] %v242
  %263 = vst [vmem:[#allocation2 + $0x160] sm:$0xf] %v255
  %264 = vst [vmem:[#allocation2 + $0x168] sm:$0xf] %v256
  %265 = vst [vmem:[#allocation2 + $0x170] sm:$0xf] %v257
  %266 = vst [vmem:[#allocation2 + $0x178] sm:$0xf] %v258
  %s267 = scalar_lea.vmem %s2, 3
  %v268 = vld [vmem:[%s267] ss:$8 sm:$0xf]
  %269 = vrot.lane.b32.xlu0 %v28, 1
  %v270 = vpop.permute.xlu0 %269
  %271 = vrot.lane.b32.xlu0 %v29, 1
  %v272 = vpop.permute.xlu0 %271
  %273 = vrot.lane.b32.xlu0 %v30, 1
  %v274 = vpop.permute.xlu0 %273
  %275 = vrot.lane.b32.xlu0 %v31, 1
  %v276 = vpop.permute.xlu0 %275
  %vm277 = vcmp.lt.s32.totalorder %v78, 1
  %v278 = vsel %vm277, %v274, %v276
  %v279 = vsel %vm277, %v272, %v274
  %v280 = vsel %vm277, %v270, %v272
  %v281 = vsel %vm277, %v276, %v270
  %v283 = vlaneseq
  %v284 = vshrl.u32 %v283, 7
  %v285 = vsub.s32 0, %v284
  %v286 = vrot.slane %v268, %v285
  %v287 = vlaneseq
  %v288 = vshrl.u32 %v287, 7
  %v289 = vsub.s32 1, %v288
  %v290 = vrot.slane %v268, %v289
  %v291 = vlaneseq
  %v292 = vshrl.u32 %v291, 7
  %v293 = vsub.s32 2, %v292
  %v294 = vrot.slane %v268, %v293
  %v295 = vlaneseq
  %v296 = vshrl.u32 %v295, 7
  %v297 = vsub.s32 3, %v296
  %v298 = vrot.slane %v268, %v297
  %v303 = vmul.f32 %v281, %v286
  %v304 = vmul.f32 %v280, %v290
  %v305 = vmul.f32 %v279, %v294
  %v306 = vmul.f32 %v278, %v298
  %307 = vrot.lane.b32.xlu0 %v26, 1
  %v308 = vpop.permute.xlu0 %307
  %309 = vrot.lane.b32.xlu0 %v111, 1
  %v310 = vpop.permute.xlu0 %309
  %311 = vrot.lane.b32.xlu0 %v27, 1
  %v312 = vpop.permute.xlu0 %311
  %313 = vrot.lane.b32.xlu0 %v112, 1
  %v314 = vpop.permute.xlu0 %313
  %v315 = vsel %vm277, %v312, %v314
  %v316 = vsel %vm277, %v310, %v312
  %v317 = vsel %vm277, %v308, %v310
  %v318 = vsel %vm277, %v314, %v308
  %v319 = vmul.f32 %v318, %v286
  %v320 = vmul.f32 %v317, %v290
  %v321 = vmul.f32 %v316, %v294
  %v322 = vmul.f32 %v315, %v298
  %323 = vst [vmem:[#allocation2 + $0x60] sm:$0xff] %v303
  %324 = vst [vmem:[#allocation2 + $0x68] sm:$0xff] %v304
  %325 = vst [vmem:[#allocation2 + $0x70] sm:$0xff] %v305
  %326 = vst [vmem:[#allocation2 + $0x78] sm:$0xff] %v306
  %327 = vst [vmem:[#allocation2 + $0x180] sm:$0xf] %v319
  %328 = vst [vmem:[#allocation2 + $0x188] sm:$0xf] %v320
  %329 = vst [vmem:[#allocation2 + $0x190] sm:$0xf] %v321
  %330 = vst [vmem:[#allocation2 + $0x198] sm:$0xf] %v322
  %331 = vst [vmem:[#allocation2 + $0x80] sm:$0xff] %v28
  %332 = vst [vmem:[#allocation2 + $0x88] sm:$0xff] %v29
  %333 = vst [vmem:[#allocation2 + $0x90] sm:$0xff] %v30
  %334 = vst [vmem:[#allocation2 + $0x98] sm:$0xff] %v31
  %335 = vst [vmem:[#allocation2 + $0x1a0] sm:$0xf] %v26
  %336 = vst [vmem:[#allocation2 + $0x1a8] sm:$0xf] %v111
  %337 = vst [vmem:[#allocation2 + $0x1b0] sm:$0xf] %v27
  %338 = vst [vmem:[#allocation2 + $0x1b8] sm:$0xf] %v112
  %s339 = scalar_lea.vmem %s2, 5
  %v340 = vld [vmem:[%s339] ss:$8 sm:$0xf]
  %341 = vrot.lane.b32.xlu0 %v28, 127
  %v342 = vpop.permute.xlu0 %341
  %343 = vrot.lane.b32.xlu0 %v29, 127
  %v344 = vpop.permute.xlu0 %343
  %345 = vrot.lane.b32.xlu0 %v30, 127
  %v346 = vpop.permute.xlu0 %345
  %347 = vrot.lane.b32.xlu0 %v31, 127
  %v348 = vpop.permute.xlu0 %347
  %vm349 = vcmp.lt.s32.totalorder %v78, 127
  %v350 = vsel %vm349, %v346, %v348
  %v351 = vsel %vm349, %v344, %v346
  %v352 = vsel %vm349, %v342, %v344
  %v353 = vsel %vm349, %v348, %v342
  %v355 = vlaneseq
  %v356 = vshrl.u32 %v355, 7
  %v357 = vsub.s32 0, %v356
  %v358 = vrot.slane %v340, %v357
  %v359 = vlaneseq
  %v360 = vshrl.u32 %v359, 7
  %v361 = vsub.s32 1, %v360
  %v362 = vrot.slane %v340, %v361
  %v363 = vlaneseq
  %v364 = vshrl.u32 %v363, 7
  %v365 = vsub.s32 2, %v364
  %v366 = vrot.slane %v340, %v365
  %v367 = vlaneseq
  %v368 = vshrl.u32 %v367, 7
  %v369 = vsub.s32 3, %v368
  %v370 = vrot.slane %v340, %v369
  %v375 = vmul.f32 %v352, %v358
  %v376 = vmul.f32 %v351, %v362
  %v377 = vmul.f32 %v350, %v366
  %v378 = vmul.f32 %v353, %v370
  %379 = vrot.lane.b32.xlu0 %v26, 127
  %v380 = vpop.permute.xlu0 %379
  %381 = vrot.lane.b32.xlu0 %v111, 127
  %v382 = vpop.permute.xlu0 %381
  %383 = vrot.lane.b32.xlu0 %v27, 127
  %v384 = vpop.permute.xlu0 %383
  %385 = vrot.lane.b32.xlu0 %v112, 127
  %v386 = vpop.permute.xlu0 %385
  %v387 = vsel %vm349, %v384, %v386
  %v388 = vsel %vm349, %v382, %v384
  %v389 = vsel %vm349, %v380, %v382
  %v390 = vsel %vm349, %v386, %v380
  %v391 = vmul.f32 %v389, %v358
  %v392 = vmul.f32 %v388, %v362
  %v393 = vmul.f32 %v387, %v366
  %v394 = vmul.f32 %v390, %v370
  %395 = vst [vmem:[#allocation2 + $0xa0] sm:$0xff] %v375
  %396 = vst [vmem:[#allocation2 + $0xa8] sm:$0xff] %v376
  %397 = vst [vmem:[#allocation2 + $0xb0] sm:$0xff] %v377
  %398 = vst [vmem:[#allocation2 + $0xb8] sm:$0xff] %v378
  %399 = vst [vmem:[#allocation2 + $0x1c0] sm:$0xf] %v391
  %400 = vst [vmem:[#allocation2 + $0x1c8] sm:$0xf] %v392
  %401 = vst [vmem:[#allocation2 + $0x1d0] sm:$0xf] %v393
  %402 = vst [vmem:[#allocation2 + $0x1d8] sm:$0xf] %v394
  %s403 = scalar_lea.vmem %s2, 6
  %v404 = vld [vmem:[%s403] ss:$8 sm:$0xf]
  %405 = vrot.lane.b32.xlu0 %v28, 113
  %v406 = vpop.permute.xlu0 %405
  %407 = vrot.lane.b32.xlu0 %v29, 113
  %v408 = vpop.permute.xlu0 %407
  %409 = vrot.lane.b32.xlu0 %v30, 113
  %v410 = vpop.permute.xlu0 %409
  %411 = vrot.lane.b32.xlu0 %v31, 113
  %v412 = vpop.permute.xlu0 %411
  %vm413 = vcmp.lt.s32.totalorder %v78, 113
  %v414 = vsel %vm413, %v410, %v412
  %v415 = vsel %vm413, %v408, %v410
  %v416 = vsel %vm413, %v406, %v408
  %v417 = vsel %vm413, %v412, %v406
  %v419 = vlaneseq
  %v420 = vshrl.u32 %v419, 7
  %v421 = vsub.s32 0, %v420
  %v422 = vrot.slane %v404, %v421
  %v423 = vlaneseq
  %v424 = vshrl.u32 %v423, 7
  %v425 = vsub.s32 1, %v424
  %v426 = vrot.slane %v404, %v425
  %v427 = vlaneseq
  %v428 = vshrl.u32 %v427, 7
  %v429 = vsub.s32 2, %v428
  %v430 = vrot.slane %v404, %v429
  %v431 = vlaneseq
  %v432 = vshrl.u32 %v431, 7
  %v433 = vsub.s32 3, %v432
  %v434 = vrot.slane %v404, %v433
  %v439 = vmul.f32 %v416, %v422
  %v440 = vmul.f32 %v415, %v426
  %v441 = vmul.f32 %v414, %v430
  %v442 = vmul.f32 %v417, %v434
  %443 = vrot.lane.b32.xlu0 %v26, 113
  %v444 = vpop.permute.xlu0 %443
  %445 = vrot.lane.b32.xlu0 %v111, 113
  %v446 = vpop.permute.xlu0 %445
  %447 = vrot.lane.b32.xlu0 %v27, 113
  %v448 = vpop.permute.xlu0 %447
  %449 = vrot.lane.b32.xlu0 %v112, 113
  %v450 = vpop.permute.xlu0 %449
  %v451 = vsel %vm413, %v448, %v450
  %v452 = vsel %vm413, %v446, %v448
  %v453 = vsel %vm413, %v444, %v446
  %v454 = vsel %vm413, %v450, %v444
  %v455 = vmul.f32 %v453, %v422
  %v456 = vmul.f32 %v452, %v426
  %v457 = vmul.f32 %v451, %v430
  %v458 = vmul.f32 %v454, %v434
  %459 = vst [vmem:[#allocation2 + $0xc0] sm:$0xff] %v439
  %460 = vst [vmem:[#allocation2 + $0xc8] sm:$0xff] %v440
  %461 = vst [vmem:[#allocation2 + $0xd0] sm:$0xff] %v441
  %462 = vst [vmem:[#allocation2 + $0xd8] sm:$0xff] %v442
  %463 = vst [vmem:[#allocation2 + $0x1e0] sm:$0xf] %v455
  %464 = vst [vmem:[#allocation2 + $0x1e8] sm:$0xf] %v456
  %465 = vst [vmem:[#allocation2 + $0x1f0] sm:$0xf] %v457
  %466 = vst [vmem:[#allocation2 + $0x1f8] sm:$0xf] %v458
  %s467 = scalar_lea.vmem %s2, 7
  %v468 = vld [vmem:[%s467] ss:$8 sm:$0xf]
  %469 = vrot.lane.b32.xlu0 %v28, 112
  %v470 = vpop.permute.xlu0 %469
  %471 = vrot.lane.b32.xlu0 %v29, 112
  %v472 = vpop.permute.xlu0 %471
  %473 = vrot.lane.b32.xlu0 %v30, 112
  %v474 = vpop.permute.xlu0 %473
  %475 = vrot.lane.b32.xlu0 %v31, 112
  %v476 = vpop.permute.xlu0 %475
  %vm477 = vcmp.lt.s32.totalorder %v78, 112
  %v478 = vsel %vm477, %v474, %v476
  %v479 = vsel %vm477, %v472, %v474
  %v480 = vsel %vm477, %v470, %v472
  %v481 = vsel %vm477, %v476, %v470
  %v483 = vlaneseq
  %v484 = vshrl.u32 %v483, 7
  %v485 = vsub.s32 0, %v484
  %v486 = vrot.slane %v468, %v485
  %v487 = vlaneseq
  %v488 = vshrl.u32 %v487, 7
  %v489 = vsub.s32 1, %v488
  %v490 = vrot.slane %v468, %v489
  %v491 = vlaneseq
  %v492 = vshrl.u32 %v491, 7
  %v493 = vsub.s32 2, %v492
  %v494 = vrot.slane %v468, %v493
  %v495 = vlaneseq
  %v496 = vshrl.u32 %v495, 7
  %v497 = vsub.s32 3, %v496
  %v498 = vrot.slane %v468, %v497
  %v503 = vmul.f32 %v480, %v486
  %v504 = vmul.f32 %v479, %v490
  %v505 = vmul.f32 %v478, %v494
  %v506 = vmul.f32 %v481, %v498
  %507 = vrot.lane.b32.xlu0 %v26, 112
  %v508 = vpop.permute.xlu0 %507
  %509 = vrot.lane.b32.xlu0 %v111, 112
  %v510 = vpop.permute.xlu0 %509
  %511 = vrot.lane.b32.xlu0 %v27, 112
  %v512 = vpop.permute.xlu0 %511
  %513 = vrot.lane.b32.xlu0 %v112, 112
  %v514 = vpop.permute.xlu0 %513
  %v515 = vsel %vm477, %v512, %v514
  %v516 = vsel %vm477, %v510, %v512
  %v517 = vsel %vm477, %v508, %v510
  %v518 = vsel %vm477, %v514, %v508
  %v519 = vmul.f32 %v517, %v486
  %v520 = vmul.f32 %v516, %v490
  %v521 = vmul.f32 %v515, %v494
  %v522 = vmul.f32 %v518, %v498
  %523 = vst [vmem:[#allocation2 + $0xe0] sm:$0xff] %v503
  %524 = vst [vmem:[#allocation2 + $0xe8] sm:$0xff] %v504
  %525 = vst [vmem:[#allocation2 + $0xf0] sm:$0xff] %v505
  %526 = vst [vmem:[#allocation2 + $0xf8] sm:$0xff] %v506
  %527 = vst [vmem:[#allocation2 + $0x200] sm:$0xf] %v519
  %528 = vst [vmem:[#allocation2 + $0x208] sm:$0xf] %v520
  %529 = vst [vmem:[#allocation2 + $0x210] sm:$0xf] %v521
  %530 = vst [vmem:[#allocation2 + $0x218] sm:$0xf] %v522
  %s531 = scalar_lea.vmem %s2, 32
  %v532 = vld [vmem:[%s531] ss:$8 sm:$0xf]
  %533 = vrot.lane.b32.xlu0 %v28, 111
  %v534 = vpop.permute.xlu0 %533
  %535 = vrot.lane.b32.xlu0 %v29, 111
  %v536 = vpop.permute.xlu0 %535
  %537 = vrot.lane.b32.xlu0 %v30, 111
  %v538 = vpop.permute.xlu0 %537
  %539 = vrot.lane.b32.xlu0 %v31, 111
  %v540 = vpop.permute.xlu0 %539
  %vm541 = vcmp.lt.s32.totalorder %v78, 111
  %v542 = vsel %vm541, %v538, %v540
  %v543 = vsel %vm541, %v536, %v538
  %v544 = vsel %vm541, %v534, %v536
  %v545 = vsel %vm541, %v540, %v534
  %v547 = vlaneseq
  %v548 = vshrl.u32 %v547, 7
  %v549 = vsub.s32 0, %v548
  %v550 = vrot.slane %v532, %v549
  %v551 = vlaneseq
  %v552 = vshrl.u32 %v551, 7
  %v553 = vsub.s32 1, %v552
  %v554 = vrot.slane %v532, %v553
  %v555 = vlaneseq
  %v556 = vshrl.u32 %v555, 7
  %v557 = vsub.s32 2, %v556
  %v558 = vrot.slane %v532, %v557
  %v559 = vlaneseq
  %v560 = vshrl.u32 %v559, 7
  %v561 = vsub.s32 3, %v560
  %v562 = vrot.slane %v532, %v561
  %v567 = vmul.f32 %v544, %v550
  %v568 = vmul.f32 %v543, %v554
  %v569 = vmul.f32 %v542, %v558
  %v570 = vmul.f32 %v545, %v562
  %571 = vrot.lane.b32.xlu0 %v26, 111
  %v572 = vpop.permute.xlu0 %571
  %573 = vrot.lane.b32.xlu0 %v111, 111
  %v574 = vpop.permute.xlu0 %573
  %575 = vrot.lane.b32.xlu0 %v27, 111
  %v576 = vpop.permute.xlu0 %575
  %577 = vrot.lane.b32.xlu0 %v112, 111
  %v578 = vpop.permute.xlu0 %577
  %v579 = vsel %vm541, %v576, %v578
  %v580 = vsel %vm541, %v574, %v576
  %v581 = vsel %vm541, %v572, %v574
  %v582 = vsel %vm541, %v578, %v572
  %v583 = vmul.f32 %v581, %v550
  %v584 = vmul.f32 %v580, %v554
  %v585 = vmul.f32 %v579, %v558
  %v586 = vmul.f32 %v582, %v562
  %587 = vst [vmem:[#allocation2 + $0x100] sm:$0xff] %v567
  %588 = vst [vmem:[#allocation2 + $0x108] sm:$0xff] %v568
  %589 = vst [vmem:[#allocation2 + $0x110] sm:$0xff] %v569
  %590 = vst [vmem:[#allocation2 + $0x118] sm:$0xff] %v570
  %591 = vst [vmem:[#allocation2 + $0x220] sm:$0xf] %v583
  %592 = vst [vmem:[#allocation2 + $0x228] sm:$0xf] %v584
  %593 = vst [vmem:[#allocation2 + $0x230] sm:$0xf] %v585
  %594 = vst [vmem:[#allocation2 + $0x238] sm:$0xf] %v586
  %v595 = vld [vmem:[%s3] sm:$0xff]
  %v596 = vld [vmem:[%s3 + $0x8] sm:$0xff]
  %v597 = vld [vmem:[%s3 + $0x10] sm:$0xff]
  %v598 = vld [vmem:[%s3 + $0x18] sm:$0xff]
  %v599 = vld [vmem:[#allocation2] sm:$0xff]
  %v600 = vld [vmem:[#allocation2 + $0x8] sm:$0xff]
  %v601 = vld [vmem:[#allocation2 + $0x10] sm:$0xff]
  %v602 = vld [vmem:[#allocation2 + $0x18] sm:$0xff]
  %v603 = vld [vmem:[#allocation2 + $0x20] sm:$0xff]
  %v604 = vld [vmem:[#allocation2 + $0x28] sm:$0xff]
  %v605 = vld [vmem:[#allocation2 + $0x30] sm:$0xff]
  %v606 = vld [vmem:[#allocation2 + $0x38] sm:$0xff]
  %v607 = vld [vmem:[#allocation2 + $0x40] sm:$0xff]
  %v608 = vld [vmem:[#allocation2 + $0x48] sm:$0xff]
  %v609 = vld [vmem:[#allocation2 + $0x50] sm:$0xff]
  %v610 = vld [vmem:[#allocation2 + $0x58] sm:$0xff]
  %v611 = vld [vmem:[#allocation2 + $0x60] sm:$0xff]
  %v612 = vld [vmem:[#allocation2 + $0x68] sm:$0xff]
  %v613 = vld [vmem:[#allocation2 + $0x70] sm:$0xff]
  %v614 = vld [vmem:[#allocation2 + $0x78] sm:$0xff]
  %v615 = vld [vmem:[#allocation2 + $0x80] sm:$0xff]
  %v616 = vld [vmem:[#allocation2 + $0x88] sm:$0xff]
  %v617 = vld [vmem:[#allocation2 + $0x90] sm:$0xff]
  %v618 = vld [vmem:[#allocation2 + $0x98] sm:$0xff]
  %v619 = vld [vmem:[#allocation2 + $0xa0] sm:$0xff]
  %v620 = vld [vmem:[#allocation2 + $0xa8] sm:$0xff]
  %v621 = vld [vmem:[#allocation2 + $0xb0] sm:$0xff]
  %v622 = vld [vmem:[#allocation2 + $0xb8] sm:$0xff]
  %v623 = vld [vmem:[#allocation2 + $0xc0] sm:$0xff]
  %v624 = vld [vmem:[#allocation2 + $0xc8] sm:$0xff]
  %v625 = vld [vmem:[#allocation2 + $0xd0] sm:$0xff]
  %v626 = vld [vmem:[#allocation2 + $0xd8] sm:$0xff]
  %v627 = vld [vmem:[#allocation2 + $0xe0] sm:$0xff]
  %v628 = vld [vmem:[#allocation2 + $0xe8] sm:$0xff]
  %v629 = vld [vmem:[#allocation2 + $0xf0] sm:$0xff]
  %v630 = vld [vmem:[#allocation2 + $0xf8] sm:$0xff]
  %v631 = vld [vmem:[#allocation2 + $0x100] sm:$0xff]
  %v632 = vld [vmem:[#allocation2 + $0x108] sm:$0xff]
  %v633 = vld [vmem:[#allocation2 + $0x110] sm:$0xff]
  %v634 = vld [vmem:[#allocation2 + $0x118] sm:$0xff]
  %v635 = vld [vmem:[#allocation2 + $0x120] sm:$0xff]
  %v636 = vld [vmem:[#allocation2 + $0x128] sm:$0xff]
  %v637 = vld [vmem:[#allocation2 + $0x130] sm:$0xff]
  %v638 = vld [vmem:[#allocation2 + $0x138] sm:$0xff]
  %v639 = vld [vmem:[#allocation2 + $0x140] sm:$0xff]
  %v640 = vld [vmem:[#allocation2 + $0x148] sm:$0xff]
  %v641 = vld [vmem:[#allocation2 + $0x150] sm:$0xff]
  %v642 = vld [vmem:[#allocation2 + $0x158] sm:$0xff]
  %v643 = vld [vmem:[#allocation2 + $0x160] sm:$0xff]
  %v644 = vld [vmem:[#allocation2 + $0x168] sm:$0xff]
  %v645 = vld [vmem:[#allocation2 + $0x170] sm:$0xff]
  %v646 = vld [vmem:[#allocation2 + $0x178] sm:$0xff]
  %v647 = vld [vmem:[#allocation2 + $0x180] sm:$0xff]
  %v648 = vld [vmem:[#allocation2 + $0x188] sm:$0xff]
  %v649 = vld [vmem:[#allocation2 + $0x190] sm:$0xff]
  %v650 = vld [vmem:[#allocation2 + $0x198] sm:$0xff]
  %v651 = vld [vmem:[#allocation2 + $0x1a0] sm:$0xff]
  %v652 = vld [vmem:[#allocation2 + $0x1a8] sm:$0xff]
  %v653 = vld [vmem:[#allocation2 + $0x1b0] sm:$0xff]
  %v654 = vld [vmem:[#allocation2 + $0x1b8] sm:$0xff]
  %v655 = vld [vmem:[#allocation2 + $0x1c0] sm:$0xff]
  %v656 = vld [vmem:[#allocation2 + $0x1c8] sm:$0xff]
  %v657 = vld [vmem:[#allocation2 + $0x1d0] sm:$0xff]
  %v658 = vld [vmem:[#allocation2 + $0x1d8] sm:$0xff]
  %v659 = vld [vmem:[#allocation2 + $0x1e0] sm:$0xff]
  %v660 = vld [vmem:[#allocation2 + $0x1e8] sm:$0xff]
  %v661 = vld [vmem:[#allocation2 + $0x1f0] sm:$0xff]
  %v662 = vld [vmem:[#allocation2 + $0x1f8] sm:$0xff]
  %v663 = vld [vmem:[#allocation2 + $0x200] sm:$0xff]
  %v664 = vld [vmem:[#allocation2 + $0x208] sm:$0xff]
  %v665 = vld [vmem:[#allocation2 + $0x210] sm:$0xff]
  %v666 = vld [vmem:[#allocation2 + $0x218] sm:$0xff]
  %v667 = vld [vmem:[#allocation2 + $0x220] sm:$0xff]
  %v668 = vld [vmem:[#allocation2 + $0x228] sm:$0xff]
  %v669 = vld [vmem:[#allocation2 + $0x230] sm:$0xff]
  %v670 = vld [vmem:[#allocation2 + $0x238] sm:$0xff]
  %v671 = vld [vmem:[%s4] sm:$0xff]
  %v672 = vld [vmem:[%s4 + $0x8] sm:$0xff]
  %674 = vset.pattern.permute.xlu0 0
  %675 = vperm.xlu0 %674, %v671
  %v676 = vpop.permute.xlu0 %675
  %679 = vset.pattern.permute.xlu0 0
  %680 = vperm.xlu0 %679, %v672
  %v681 = vpop.permute.xlu0 %680
  %vm683 = vcmask 130048
  %v685 = vsel %vm683, %v596, 0
  %v688 = vsel %vm683, %v598, 0
  %690 = vmatprep.subr.mxu0 %v660
  %691 = vmatpush1.msra.mxu0 %v659
  %692 = vmatprep.subr.mxu0 %v656
  %693 = vmatpush1.msra.mxu0 %v655
  %694 = vmatprep.subr.mxu0 %v652
  %695 = vmatpush1.msra.mxu0 %v651
  %696 = vmatprep.subr.mxu0 %v648
  %697 = vmatpush1.msra.mxu0 %v647
  %698 = vmatprep.subr.mxu0 %v644
  %699 = vmatpush1.msra.mxu0 %v643
  %700 = vmatprep.subr.mxu0 %v640
  %701 = vmatpush1.msra.mxu0 %v639
  %702 = vmatprep.subr.mxu0 %v636
  %703 = vmatpush1.msra.mxu0 %v635
  %704 = vmatprep.subr.mxu0 %v632
  %705 = vmatpush1.msra.mxu0 %v631
  %706 = vmatprep.subr.mxu0 %v628
  %707 = vmatpush1.msra.mxu0 %v627
  %708 = vmatprep.subr.mxu0 %v624
  %709 = vmatpush1.msra.mxu0 %v623
  %710 = vmatprep.subr.mxu0 %v620
  %711 = vmatpush1.msra.mxu0 %v619
  %712 = vmatprep.subr.mxu0 %v616
  %713 = vmatpush1.msra.mxu0 %v615
  %714 = vmatprep.subr.mxu0 %v612
  %715 = vmatpush1.msra.mxu0 %v611
  %716 = vmatprep.subr.mxu0 %v608
  %717 = vmatpush1.msra.mxu0 %v607
  %718 = vmatprep.subr.mxu0 %v604
  %719 = vmatpush1.msra.mxu0 %v603
  %720 = vmatprep.subr.mxu0 %v600
  %721 = vmatpush1.msra.mxu0 %v599
  %722 = vmatprep.subr.mxu0 0.0
  %723 = vmatpush2.msra.mxu0 0.0
  %724 = vmatprep.subr.mxu0 0.0
  %725 = vmatpush2.msra.mxu0 0.0
  %726 = vmatprep.subr.mxu0 0.0
  %727 = vmatpush2.msra.mxu0 0.0
  %728 = vmatprep.subr.mxu0 0.0
  %729 = vmatpush2.msra.mxu0 0.0
  %730 = vmatprep.subr.mxu0 0.0
  %731 = vmatpush2.msra.mxu0 0.0
  %732 = vmatprep.subr.mxu0 0.0
  %733 = vmatpush2.msra.mxu0 0.0
  %734 = vmatprep.subr.mxu0 0.0
  %735 = vmatpush2.msra.mxu0 0.0
  %736 = vmatprep.subr.mxu0 0.0
  %737 = vmatpush2.msra.mxu0 0.0
  %738 = vmatprep.subr.mxu0 0.0
  %739 = vmatpush2.msra.mxu0 0.0
  %740 = vmatprep.subr.mxu0 0.0
  %741 = vmatpush2.msra.mxu0 0.0
  %742 = vmatprep.subr.mxu0 0.0
  %743 = vmatpush2.msra.mxu0 0.0
  %744 = vmatprep.subr.mxu0 0.0
  %745 = vmatpush2.msra.mxu0 0.0
  %746 = vmatprep.subr.mxu0 0.0
  %747 = vmatpush2.msra.mxu0 0.0
  %748 = vmatprep.subr.mxu0 0.0
  %749 = vmatpush2.msra.mxu0 0.0
  %750 = vmatprep.subr.mxu0 %v668
  %751 = vmatpush2.msra.mxu0 %v667
  %752 = vmatprep.subr.mxu0 %v664
  %753 = vmatpush2.msra.mxu0 %v663
  %754 = vmatprep.mubr.f32.mxu0 %v685
  %755 = vmatmul.mubr.f32.gmra.mxu0 %v595
  %v756 = vpop.f32.mrf.mxu0
  %v757 = vadd.f32 %v676, %v756
  %v758 = vpop.f32.mrf.mxu0
  %v759 = vadd.f32 %v676, %v758
  %760 = vmatprep.mubr.f32.mxu0 %v688
  %761 = vmatmul.mubr.f32.gmra.mxu0 %v597
  %v762 = vpop.f32.mrf.mxu0
  %v763 = vadd.f32 %v681, %v762
  %v764 = vpop.f32.mrf.mxu0
  %v765 = vadd.f32 %v681, %v764
  %766 = vdwg.mxu0
  %767 = vmatprep.subr.mxu0 %v662
  %768 = vmatpush1.msra.mxu0 %v661
  %769 = vmatprep.subr.mxu0 %v658
  %770 = vmatpush1.msra.mxu0 %v657
  %771 = vmatprep.subr.mxu0 %v654
  %772 = vmatpush1.msra.mxu0 %v653
  %773 = vmatprep.subr.mxu0 %v650
  %774 = vmatpush1.msra.mxu0 %v649
  %775 = vmatprep.subr.mxu0 %v646
  %776 = vmatpush1.msra.mxu0 %v645
  %777 = vmatprep.subr.mxu0 %v642
  %778 = vmatpush1.msra.mxu0 %v641
  %779 = vmatprep.subr.mxu0 %v638
  %780 = vmatpush1.msra.mxu0 %v637
  %781 = vmatprep.subr.mxu0 %v634
  %782 = vmatpush1.msra.mxu0 %v633
  %783 = vmatprep.subr.mxu0 %v630
  %784 = vmatpush1.msra.mxu0 %v629
  %785 = vmatprep.subr.mxu0 %v626
  %786 = vmatpush1.msra.mxu0 %v625
  %787 = vmatprep.subr.mxu0 %v622
  %788 = vmatpush1.msra.mxu0 %v621
  %789 = vmatprep.subr.mxu0 %v618
  %790 = vmatpush1.msra.mxu0 %v617
  %791 = vmatprep.subr.mxu0 %v614
  %792 = vmatpush1.msra.mxu0 %v613
  %793 = vmatprep.subr.mxu0 %v610
  %794 = vmatpush1.msra.mxu0 %v609
  %795 = vmatprep.subr.mxu0 %v606
  %796 = vmatpush1.msra.mxu0 %v605
  %797 = vmatprep.subr.mxu0 %v602
  %798 = vmatpush1.msra.mxu0 %v601
  %799 = vmatprep.subr.mxu0 0.0
  %800 = vmatpush2.msra.mxu0 0.0
  %801 = vmatprep.subr.mxu0 0.0
  %802 = vmatpush2.msra.mxu0 0.0
  %803 = vmatprep.subr.mxu0 0.0
  %804 = vmatpush2.msra.mxu0 0.0
  %805 = vmatprep.subr.mxu0 0.0
  %806 = vmatpush2.msra.mxu0 0.0
  %807 = vmatprep.subr.mxu0 0.0
  %808 = vmatpush2.msra.mxu0 0.0
  %809 = vmatprep.subr.mxu0 0.0
  %810 = vmatpush2.msra.mxu0 0.0
  %811 = vmatprep.subr.mxu0 0.0
  %812 = vmatpush2.msra.mxu0 0.0
  %813 = vmatprep.subr.mxu0 0.0
  %814 = vmatpush2.msra.mxu0 0.0
  %815 = vmatprep.subr.mxu0 0.0
  %816 = vmatpush2.msra.mxu0 0.0
  %817 = vmatprep.subr.mxu0 0.0
  %818 = vmatpush2.msra.mxu0 0.0
  %819 = vmatprep.subr.mxu0 0.0
  %820 = vmatpush2.msra.mxu0 0.0
  %821 = vmatprep.subr.mxu0 0.0
  %822 = vmatpush2.msra.mxu0 0.0
  %823 = vmatprep.subr.mxu0 0.0
  %824 = vmatpush2.msra.mxu0 0.0
  %825 = vmatprep.subr.mxu0 0.0
  %826 = vmatpush2.msra.mxu0 0.0
  %827 = vmatprep.subr.mxu0 %v670
  %828 = vmatpush2.msra.mxu0 %v669
  %829 = vmatprep.subr.mxu0 %v666
  %830 = vmatpush2.msra.mxu0 %v665
  %831 = vmatprep.mubr.f32.mxu0 %v685
  %832 = vmatmul.mubr.f32.gmra.mxu0 %v595
  %v833 = vpop.f32.mrf.mxu0
  %v834 = vadd.f32 %v676, %v833
  %v835 = vpop.f32.mrf.mxu0
  %v836 = vadd.f32 %v676, %v835
  %837 = vmatprep.mubr.f32.mxu0 %v688
  %838 = vmatmul.mubr.f32.gmra.mxu0 %v597
  %v839 = vpop.f32.mrf.mxu0
  %v840 = vadd.f32 %v681, %v839
  %v841 = vpop.f32.mrf.mxu0
  %v842 = vadd.f32 %v681, %v841
  %843 = vdwg.mxu0
  %v844 = vxor.u32 %v757, 2147483648
  %v845 = vxor.u32 %v759, 2147483648
  %v846 = vxor.u32 %v834, 2147483648
  %v847 = vxor.u32 %v836, 2147483648
  %v848 = vmul.f32 %v844, 1.442695
  %v849 = vpow.pop %v848
  %v850 = vmul.f32 %v845, 1.442695
  %v851 = vpow.pop %v850
  %v852 = vmul.f32 %v846, 1.442695
  %v853 = vpow.pop %v852
  %v854 = vmul.f32 %v847, 1.442695
  %v855 = vpow.pop %v854
  %v856 = vadd.f32 %v849, 1.0
  %v857 = vadd.f32 %v851, 1.0
  %v858 = vadd.f32 %v853, 1.0
  %v859 = vadd.f32 %v855, 1.0
  %v860 = vrcp.pop %v856
  %v861 = vmul.f32 1.0, %v860
  %v862 = vrcp.pop %v857
  %v863 = vmul.f32 1.0, %v862
  %v864 = vrcp.pop %v858
  %v865 = vmul.f32 1.0, %v864
  %v866 = vrcp.pop %v859
  %v867 = vmul.f32 1.0, %v866
  %v868 = vxor.u32 %v763, 2147483648
  %v869 = vxor.u32 %v765, 2147483648
  %v870 = vxor.u32 %v840, 2147483648
  %v871 = vxor.u32 %v842, 2147483648
  %v872 = vmul.f32 %v868, 1.442695
  %v873 = vpow.pop %v872
  %v874 = vmul.f32 %v869, 1.442695
  %v875 = vpow.pop %v874
  %v876 = vmul.f32 %v870, 1.442695
  %v877 = vpow.pop %v876
  %v878 = vmul.f32 %v871, 1.442695
  %v879 = vpow.pop %v878
  %v880 = vadd.f32 %v873, 1.0
  %v881 = vadd.f32 %v875, 1.0
  %v882 = vadd.f32 %v877, 1.0
  %v883 = vadd.f32 %v879, 1.0
  %v884 = vrcp.pop %v880
  %v885 = vmul.f32 1.0, %v884
  %v886 = vrcp.pop %v881
  %v887 = vmul.f32 1.0, %v886
  %v888 = vrcp.pop %v882
  %v889 = vmul.f32 1.0, %v888
  %v890 = vrcp.pop %v883
  %v891 = vmul.f32 1.0, %v890
  %892 = vrot.lane.b32.xlu0 %v861, 17
  %v893 = vpop.permute.xlu0 %892
  %894 = vrot.lane.b32.xlu0 %v863, 17
  %v895 = vpop.permute.xlu0 %894
  %896 = vrot.lane.b32.xlu0 %v865, 17
  %v897 = vpop.permute.xlu0 %896
  %898 = vrot.lane.b32.xlu0 %v867, 17
  %v899 = vpop.permute.xlu0 %898
  %v900 = vsel %vm79, %v897, %v899
  %v901 = vsel %vm79, %v895, %v897
  %v902 = vsel %vm79, %v893, %v895
  %v903 = vsel %vm79, %v899, %v893
  %v904 = vld [vmem:[#allocation2] sm:$0xff]
  %v905 = vld [vmem:[#allocation2 + $0x8] sm:$0xff]
  %v906 = vld [vmem:[#allocation2 + $0x10] sm:$0xff]
  %v907 = vld [vmem:[#allocation2 + $0x18] sm:$0xff]
  %v908 = vmul.f32 %v904, %v903
  %v909 = vmul.f32 %v905, %v902
  %v910 = vmul.f32 %v906, %v901
  %v911 = vmul.f32 %v907, %v900
  %912 = vst [vmem:[#allocation2] sm:$0xff] %v908
  %913 = vst [vmem:[#allocation2 + $0x8] sm:$0xff] %v909
  %914 = vst [vmem:[#allocation2 + $0x10] sm:$0xff] %v910
  %915 = vst [vmem:[#allocation2 + $0x18] sm:$0xff] %v911
  %916 = vrot.lane.b32.xlu0 %v861, 16
  %v917 = vpop.permute.xlu0 %916
  %918 = vrot.lane.b32.xlu0 %v863, 16
  %v919 = vpop.permute.xlu0 %918
  %920 = vrot.lane.b32.xlu0 %v865, 16
  %v921 = vpop.permute.xlu0 %920
  %922 = vrot.lane.b32.xlu0 %v867, 16
  %v923 = vpop.permute.xlu0 %922
  %v924 = vsel %vm149, %v921, %v923
  %v925 = vsel %vm149, %v919, %v921
  %v926 = vsel %vm149, %v917, %v919
  %v927 = vsel %vm149, %v923, %v917
  %v928 = vld [vmem:[#allocation2 + $0x20] sm:$0xff]
  %v929 = vld [vmem:[#allocation2 + $0x28] sm:$0xff]
  %v930 = vld [vmem:[#allocation2 + $0x30] sm:$0xff]
  %v931 = vld [vmem:[#allocation2 + $0x38] sm:$0xff]
  %v932 = vmul.f32 %v928, %v927
  %v933 = vmul.f32 %v929, %v926
  %v934 = vmul.f32 %v930, %v925
  %v935 = vmul.f32 %v931, %v924
  %936 = vst [vmem:[#allocation2 + $0x20] sm:$0xff] %v932
  %937 = vst [vmem:[#allocation2 + $0x28] sm:$0xff] %v933
  %938 = vst [vmem:[#allocation2 + $0x30] sm:$0xff] %v934
  %939 = vst [vmem:[#allocation2 + $0x38] sm:$0xff] %v935
  %940 = vrot.lane.b32.xlu0 %v861, 15
  %v941 = vpop.permute.xlu0 %940
  %942 = vrot.lane.b32.xlu0 %v863, 15
  %v943 = vpop.permute.xlu0 %942
  %944 = vrot.lane.b32.xlu0 %v865, 15
  %v945 = vpop.permute.xlu0 %944
  %946 = vrot.lane.b32.xlu0 %v867, 15
  %v947 = vpop.permute.xlu0 %946
  %v948 = vsel %vm213, %v945, %v947
  %v949 = vsel %vm213, %v943, %v945
  %v950 = vsel %vm213, %v941, %v943
  %v951 = vsel %vm213, %v947, %v941
  %v952 = vld [vmem:[#allocation2 + $0x40] sm:$0xff]
  %v953 = vld [vmem:[#allocation2 + $0x48] sm:$0xff]
  %v954 = vld [vmem:[#allocation2 + $0x50] sm:$0xff]
  %v955 = vld [vmem:[#allocation2 + $0x58] sm:$0xff]
  %v956 = vmul.f32 %v952, %v951
  %v957 = vmul.f32 %v953, %v950
  %v958 = vmul.f32 %v954, %v949
  %v959 = vmul.f32 %v955, %v948
  %960 = vst [vmem:[#allocation2 + $0x40] sm:$0xff] %v956
  %961 = vst [vmem:[#allocation2 + $0x48] sm:$0xff] %v957
  %962 = vst [vmem:[#allocation2 + $0x50] sm:$0xff] %v958
  %963 = vst [vmem:[#allocation2 + $0x58] sm:$0xff] %v959
  %964 = vrot.lane.b32.xlu0 %v861, 1
  %v965 = vpop.permute.xlu0 %964
  %966 = vrot.lane.b32.xlu0 %v863, 1
  %v967 = vpop.permute.xlu0 %966
  %968 = vrot.lane.b32.xlu0 %v865, 1
  %v969 = vpop.permute.xlu0 %968
  %970 = vrot.lane.b32.xlu0 %v867, 1
  %v971 = vpop.permute.xlu0 %970
  %v972 = vsel %vm277, %v969, %v971
  %v973 = vsel %vm277, %v967, %v969
  %v974 = vsel %vm277, %v965, %v967
  %v975 = vsel %vm277, %v971, %v965
  %v976 = vld [vmem:[#allocation2 + $0x60] sm:$0xff]
  %v977 = vld [vmem:[#allocation2 + $0x68] sm:$0xff]
  %v978 = vld [vmem:[#allocation2 + $0x70] sm:$0xff]
  %v979 = vld [vmem:[#allocation2 + $0x78] sm:$0xff]
  %v980 = vmul.f32 %v976, %v975
  %v981 = vmul.f32 %v977, %v974
  %v982 = vmul.f32 %v978, %v973
  %v983 = vmul.f32 %v979, %v972
  %984 = vst [vmem:[#allocation2 + $0x60] sm:$0xff] %v980
  %985 = vst [vmem:[#allocation2 + $0x68] sm:$0xff] %v981
  %986 = vst [vmem:[#allocation2 + $0x70] sm:$0xff] %v982
  %987 = vst [vmem:[#allocation2 + $0x78] sm:$0xff] %v983
  %v988 = vld [vmem:[#allocation2 + $0x80] sm:$0xff]
  %v989 = vld [vmem:[#allocation2 + $0x88] sm:$0xff]
  %v990 = vld [vmem:[#allocation2 + $0x90] sm:$0xff]
  %v991 = vld [vmem:[#allocation2 + $0x98] sm:$0xff]
  %v992 = vmul.f32 %v988, %v861
  %v993 = vmul.f32 %v989, %v863
  %v994 = vmul.f32 %v990, %v865
  %v995 = vmul.f32 %v991, %v867
  %996 = vst [vmem:[#allocation2 + $0x80] sm:$0xff] %v992
  %997 = vst [vmem:[#allocation2 + $0x88] sm:$0xff] %v993
  %998 = vst [vmem:[#allocation2 + $0x90] sm:$0xff] %v994
  %999 = vst [vmem:[#allocation2 + $0x98] sm:$0xff] %v995
  %1000 = vrot.lane.b32.xlu0 %v861, 127
  %v1001 = vpop.permute.xlu0 %1000
  %1002 = vrot.lane.b32.xlu0 %v863, 127
  %v1003 = vpop.permute.xlu0 %1002
  %1004 = vrot.lane.b32.xlu0 %v865, 127
  %v1005 = vpop.permute.xlu0 %1004
  %1006 = vrot.lane.b32.xlu0 %v867, 127
  %v1007 = vpop.permute.xlu0 %1006
  %v1008 = vsel %vm349, %v1005, %v1007
  %v1009 = vsel %vm349, %v1003, %v1005
  %v1010 = vsel %vm349, %v1001, %v1003
  %v1011 = vsel %vm349, %v1007, %v1001
  %v1012 = vld [vmem:[#allocation2 + $0xa0] sm:$0xff]
  %v1013 = vld [vmem:[#allocation2 + $0xa8] sm:$0xff]
  %v1014 = vld [vmem:[#allocation2 + $0xb0] sm:$0xff]
  %v1015 = vld [vmem:[#allocation2 + $0xb8] sm:$0xff]
  %v1016 = vmul.f32 %v1012, %v1010
  %v1017 = vmul.f32 %v1013, %v1009
  %v1018 = vmul.f32 %v1014, %v1008
  %v1019 = vmul.f32 %v1015, %v1011
  %1020 = vst [vmem:[#allocation2 + $0xa0] sm:$0xff] %v1016
  %1021 = vst [vmem:[#allocation2 + $0xa8] sm:$0xff] %v1017
  %1022 = vst [vmem:[#allocation2 + $0xb0] sm:$0xff] %v1018
  %1023 = vst [vmem:[#allocation2 + $0xb8] sm:$0xff] %v1019
  %1024 = vrot.lane.b32.xlu0 %v861, 113
  %v1025 = vpop.permute.xlu0 %1024
  %1026 = vrot.lane.b32.xlu0 %v863, 113
  %v1027 = vpop.permute.xlu0 %1026
  %1028 = vrot.lane.b32.xlu0 %v865, 113
  %v1029 = vpop.permute.xlu0 %1028
  %1030 = vrot.lane.b32.xlu0 %v867, 113
  %v1031 = vpop.permute.xlu0 %1030
  %v1032 = vsel %vm413, %v1029, %v1031
  %v1033 = vsel %vm413, %v1027, %v1029
  %v1034 = vsel %vm413, %v1025, %v1027
  %v1035 = vsel %vm413, %v1031, %v1025
  %v1036 = vld [vmem:[#allocation2 + $0xc0] sm:$0xff]
  %v1037 = vld [vmem:[#allocation2 + $0xc8] sm:$0xff]
  %v1038 = vld [vmem:[#allocation2 + $0xd0] sm:$0xff]
  %v1039 = vld [vmem:[#allocation2 + $0xd8] sm:$0xff]
  %v1040 = vmul.f32 %v1036, %v1034
  %v1041 = vmul.f32 %v1037, %v1033
  %v1042 = vmul.f32 %v1038, %v1032
  %v1043 = vmul.f32 %v1039, %v1035
  %1044 = vst [vmem:[#allocation2 + $0xc0] sm:$0xff] %v1040
  %1045 = vst [vmem:[#allocation2 + $0xc8] sm:$0xff] %v1041
  %1046 = vst [vmem:[#allocation2 + $0xd0] sm:$0xff] %v1042
  %1047 = vst [vmem:[#allocation2 + $0xd8] sm:$0xff] %v1043
  %1048 = vrot.lane.b32.xlu0 %v861, 112
  %v1049 = vpop.permute.xlu0 %1048
  %1050 = vrot.lane.b32.xlu0 %v863, 112
  %v1051 = vpop.permute.xlu0 %1050
  %1052 = vrot.lane.b32.xlu0 %v865, 112
  %v1053 = vpop.permute.xlu0 %1052
  %1054 = vrot.lane.b32.xlu0 %v867, 112
  %v1055 = vpop.permute.xlu0 %1054
  %v1056 = vsel %vm477, %v1053, %v1055
  %v1057 = vsel %vm477, %v1051, %v1053
  %v1058 = vsel %vm477, %v1049, %v1051
  %v1059 = vsel %vm477, %v1055, %v1049
  %v1060 = vld [vmem:[#allocation2 + $0xe0] sm:$0xff]
  %v1061 = vld [vmem:[#allocation2 + $0xe8] sm:$0xff]
  %v1062 = vld [vmem:[#allocation2 + $0xf0] sm:$0xff]
  %v1063 = vld [vmem:[#allocation2 + $0xf8] sm:$0xff]
  %v1064 = vmul.f32 %v1060, %v1058
  %v1065 = vmul.f32 %v1061, %v1057
  %v1066 = vmul.f32 %v1062, %v1056
  %v1067 = vmul.f32 %v1063, %v1059
  %1068 = vst [vmem:[#allocation2 + $0xe0] sm:$0xff] %v1064
  %1069 = vst [vmem:[#allocation2 + $0xe8] sm:$0xff] %v1065
  %1070 = vst [vmem:[#allocation2 + $0xf0] sm:$0xff] %v1066
  %1071 = vst [vmem:[#allocation2 + $0xf8] sm:$0xff] %v1067
  %1072 = vrot.lane.b32.xlu0 %v861, 111
  %v1073 = vpop.permute.xlu0 %1072
  %1074 = vrot.lane.b32.xlu0 %v863, 111
  %v1075 = vpop.permute.xlu0 %1074
  %1076 = vrot.lane.b32.xlu0 %v865, 111
  %v1077 = vpop.permute.xlu0 %1076
  %1078 = vrot.lane.b32.xlu0 %v867, 111
  %v1079 = vpop.permute.xlu0 %1078
  %v1080 = vsel %vm541, %v1077, %v1079
  %v1081 = vsel %vm541, %v1075, %v1077
  %v1082 = vsel %vm541, %v1073, %v1075
  %v1083 = vsel %vm541, %v1079, %v1073
  %v1084 = vld [vmem:[#allocation2 + $0x100] sm:$0xff]
  %v1085 = vld [vmem:[#allocation2 + $0x108] sm:$0xff]
  %v1086 = vld [vmem:[#allocation2 + $0x110] sm:$0xff]
  %v1087 = vld [vmem:[#allocation2 + $0x118] sm:$0xff]
  %v1088 = vmul.f32 %v1084, %v1082
  %v1089 = vmul.f32 %v1085, %v1081
  %v1090 = vmul.f32 %v1086, %v1080
  %v1091 = vmul.f32 %v1087, %v1083
  %1092 = vst [vmem:[#allocation2 + $0x100] sm:$0xff] %v1088
  %1093 = vst [vmem:[#allocation2 + $0x108] sm:$0xff] %v1089
  %1094 = vst [vmem:[#allocation2 + $0x110] sm:$0xff] %v1090
  %1095 = vst [vmem:[#allocation2 + $0x118] sm:$0xff] %v1091
  %v1096 = vld [vmem:[%s5] sm:$0xff]
  %v1097 = vld [vmem:[%s5 + $0x8] sm:$0xff]
  %v1098 = vld [vmem:[#allocation2] sm:$0xff]
  %v1099 = vld [vmem:[#allocation2 + $0x8] sm:$0xff]
  %v1100 = vld [vmem:[#allocation2 + $0x10] sm:$0xff]
  %v1101 = vld [vmem:[#allocation2 + $0x18] sm:$0xff]
  %v1102 = vld [vmem:[#allocation2 + $0x20] sm:$0xff]
  %v1103 = vld [vmem:[#allocation2 + $0x28] sm:$0xff]
  %v1104 = vld [vmem:[#allocation2 + $0x30] sm:$0xff]
  %v1105 = vld [vmem:[#allocation2 + $0x38] sm:$0xff]
  %v1106 = vld [vmem:[#allocation2 + $0x40] sm:$0xff]
  %v1107 = vld [vmem:[#allocation2 + $0x48] sm:$0xff]
  %v1108 = vld [vmem:[#allocation2 + $0x50] sm:$0xff]
  %v1109 = vld [vmem:[#allocation2 + $0x58] sm:$0xff]
  %v1110 = vld [vmem:[#allocation2 + $0x60] sm:$0xff]
  %v1111 = vld [vmem:[#allocation2 + $0x68] sm:$0xff]
  %v1112 = vld [vmem:[#allocation2 + $0x70] sm:$0xff]
  %v1113 = vld [vmem:[#allocation2 + $0x78] sm:$0xff]
  %v1114 = vld [vmem:[#allocation2 + $0x80] sm:$0xff]
  %v1115 = vld [vmem:[#allocation2 + $0x88] sm:$0xff]
  %v1116 = vld [vmem:[#allocation2 + $0x90] sm:$0xff]
  %v1117 = vld [vmem:[#allocation2 + $0x98] sm:$0xff]
  %v1118 = vld [vmem:[#allocation2 + $0xa0] sm:$0xff]
  %v1119 = vld [vmem:[#allocation2 + $0xa8] sm:$0xff]
  %v1120 = vld [vmem:[#allocation2 + $0xb0] sm:$0xff]
  %v1121 = vld [vmem:[#allocation2 + $0xb8] sm:$0xff]
  %v1122 = vld [vmem:[#allocation2 + $0xc0] sm:$0xff]
  %v1123 = vld [vmem:[#allocation2 + $0xc8] sm:$0xff]
  %v1124 = vld [vmem:[#allocation2 + $0xd0] sm:$0xff]
  %v1125 = vld [vmem:[#allocation2 + $0xd8] sm:$0xff]
  %v1126 = vld [vmem:[#allocation2 + $0xe0] sm:$0xff]
  %v1127 = vld [vmem:[#allocation2 + $0xe8] sm:$0xff]
  %v1128 = vld [vmem:[#allocation2 + $0xf0] sm:$0xff]
  %v1129 = vld [vmem:[#allocation2 + $0xf8] sm:$0xff]
  %v1130 = vld [vmem:[#allocation2 + $0x100] sm:$0xff]
  %v1131 = vld [vmem:[#allocation2 + $0x108] sm:$0xff]
  %v1132 = vld [vmem:[#allocation2 + $0x110] sm:$0xff]
  %v1133 = vld [vmem:[#allocation2 + $0x118] sm:$0xff]
  %v1134 = vld [vmem:[#allocation2 + $0x120] sm:$0xff]
  %v1135 = vld [vmem:[#allocation2 + $0x128] sm:$0xff]
  %v1136 = vld [vmem:[#allocation2 + $0x130] sm:$0xff]
  %v1137 = vld [vmem:[#allocation2 + $0x138] sm:$0xff]
  %v1138 = vld [vmem:[#allocation2 + $0x140] sm:$0xff]
  %v1139 = vld [vmem:[#allocation2 + $0x148] sm:$0xff]
  %v1140 = vld [vmem:[#allocation2 + $0x150] sm:$0xff]
  %v1141 = vld [vmem:[#allocation2 + $0x158] sm:$0xff]
  %v1142 = vld [vmem:[#allocation2 + $0x160] sm:$0xff]
  %v1143 = vld [vmem:[#allocation2 + $0x168] sm:$0xff]
  %v1144 = vld [vmem:[#allocation2 + $0x170] sm:$0xff]
  %v1145 = vld [vmem:[#allocation2 + $0x178] sm:$0xff]
  %v1146 = vld [vmem:[#allocation2 + $0x180] sm:$0xff]
  %v1147 = vld [vmem:[#allocation2 + $0x188] sm:$0xff]
  %v1148 = vld [vmem:[#allocation2 + $0x190] sm:$0xff]
  %v1149 = vld [vmem:[#allocation2 + $0x198] sm:$0xff]
  %v1150 = vld [vmem:[#allocation2 + $0x1a0] sm:$0xff]
  %v1151 = vld [vmem:[#allocation2 + $0x1a8] sm:$0xff]
  %v1152 = vld [vmem:[#allocation2 + $0x1b0] sm:$0xff]
  %v1153 = vld [vmem:[#allocation2 + $0x1b8] sm:$0xff]
  %v1154 = vld [vmem:[#allocation2 + $0x1c0] sm:$0xff]
  %v1155 = vld [vmem:[#allocation2 + $0x1c8] sm:$0xff]
  %v1156 = vld [vmem:[#allocation2 + $0x1d0] sm:$0xff]
  %v1157 = vld [vmem:[#allocation2 + $0x1d8] sm:$0xff]
  %v1158 = vld [vmem:[#allocation2 + $0x1e0] sm:$0xff]
  %v1159 = vld [vmem:[#allocation2 + $0x1e8] sm:$0xff]
  %v1160 = vld [vmem:[#allocation2 + $0x1f0] sm:$0xff]
  %v1161 = vld [vmem:[#allocation2 + $0x1f8] sm:$0xff]
  %v1162 = vld [vmem:[#allocation2 + $0x200] sm:$0xff]
  %v1163 = vld [vmem:[#allocation2 + $0x208] sm:$0xff]
  %v1164 = vld [vmem:[#allocation2 + $0x210] sm:$0xff]
  %v1165 = vld [vmem:[#allocation2 + $0x218] sm:$0xff]
  %v1166 = vld [vmem:[#allocation2 + $0x220] sm:$0xff]
  %v1167 = vld [vmem:[#allocation2 + $0x228] sm:$0xff]
  %v1168 = vld [vmem:[#allocation2 + $0x230] sm:$0xff]
  %v1169 = vld [vmem:[#allocation2 + $0x238] sm:$0xff]
  %v1170 = vld [vmem:[%s6] sm:$0xff]
  %1172 = vset.pattern.permute.xlu0 0
  %1173 = vperm.xlu0 %1172, %v1170
  %v1174 = vpop.permute.xlu0 %1173
  %v1177 = vsel %vm683, %v1097, 0
  %1179 = vmatprep.subr.mxu0 %v1159
  %1180 = vmatpush1.msra.mxu0 %v1158
  %1181 = vmatprep.subr.mxu0 %v1155
  %1182 = vmatpush1.msra.mxu0 %v1154
  %1183 = vmatprep.subr.mxu0 %v1151
  %1184 = vmatpush1.msra.mxu0 %v1150
  %1185 = vmatprep.subr.mxu0 %v1147
  %1186 = vmatpush1.msra.mxu0 %v1146
  %1187 = vmatprep.subr.mxu0 %v1143
  %1188 = vmatpush1.msra.mxu0 %v1142
  %1189 = vmatprep.subr.mxu0 %v1139
  %1190 = vmatpush1.msra.mxu0 %v1138
  %1191 = vmatprep.subr.mxu0 %v1135
  %1192 = vmatpush1.msra.mxu0 %v1134
  %1193 = vmatprep.subr.mxu0 %v1131
  %1194 = vmatpush1.msra.mxu0 %v1130
  %1195 = vmatprep.subr.mxu0 %v1127
  %1196 = vmatpush1.msra.mxu0 %v1126
  %1197 = vmatprep.subr.mxu0 %v1123
  %1198 = vmatpush1.msra.mxu0 %v1122
  %1199 = vmatprep.subr.mxu0 %v1119
  %1200 = vmatpush1.msra.mxu0 %v1118
  %1201 = vmatprep.subr.mxu0 %v1115
  %1202 = vmatpush1.msra.mxu0 %v1114
  %1203 = vmatprep.subr.mxu0 %v1111
  %1204 = vmatpush1.msra.mxu0 %v1110
  %1205 = vmatprep.subr.mxu0 %v1107
  %1206 = vmatpush1.msra.mxu0 %v1106
  %1207 = vmatprep.subr.mxu0 %v1103
  %1208 = vmatpush1.msra.mxu0 %v1102
  %1209 = vmatprep.subr.mxu0 %v1099
  %1210 = vmatpush1.msra.mxu0 %v1098
  %1211 = vmatprep.subr.mxu0 0.0
  %1212 = vmatpush2.msra.mxu0 0.0
  %1213 = vmatprep.subr.mxu0 0.0
  %1214 = vmatpush2.msra.mxu0 0.0
  %1215 = vmatprep.subr.mxu0 0.0
  %1216 = vmatpush2.msra.mxu0 0.0
  %1217 = vmatprep.subr.mxu0 0.0
  %1218 = vmatpush2.msra.mxu0 0.0
  %1219 = vmatprep.subr.mxu0 0.0
  %1220 = vmatpush2.msra.mxu0 0.0
  %1221 = vmatprep.subr.mxu0 0.0
  %1222 = vmatpush2.msra.mxu0 0.0
  %1223 = vmatprep.subr.mxu0 0.0
  %1224 = vmatpush2.msra.mxu0 0.0
  %1225 = vmatprep.subr.mxu0 0.0
  %1226 = vmatpush2.msra.mxu0 0.0
  %1227 = vmatprep.subr.mxu0 0.0
  %1228 = vmatpush2.msra.mxu0 0.0
  %1229 = vmatprep.subr.mxu0 0.0
  %1230 = vmatpush2.msra.mxu0 0.0
  %1231 = vmatprep.subr.mxu0 0.0
  %1232 = vmatpush2.msra.mxu0 0.0
  %1233 = vmatprep.subr.mxu0 0.0
  %1234 = vmatpush2.msra.mxu0 0.0
  %1235 = vmatprep.subr.mxu0 0.0
  %1236 = vmatpush2.msra.mxu0 0.0
  %1237 = vmatprep.subr.mxu0 0.0
  %1238 = vmatpush2.msra.mxu0 0.0
  %1239 = vmatprep.subr.mxu0 %v1167
  %1240 = vmatpush2.msra.mxu0 %v1166
  %1241 = vmatprep.subr.mxu0 %v1163
  %1242 = vmatpush2.msra.mxu0 %v1162
  %1243 = vmatprep.mubr.f32.mxu0 %v1177
  %1244 = vmatmul.mubr.f32.gmra.mxu0 %v1096
  %v1245 = vpop.f32.mrf.mxu0
  %v1246 = vadd.f32 %v1174, %v1245
  %v1247 = vpop.f32.mrf.mxu0
  %v1248 = vadd.f32 %v1174, %v1247
  %1249 = vdwg.mxu0
  %1250 = vmatprep.subr.mxu0 %v1161
  %1251 = vmatpush1.msra.mxu0 %v1160
  %1252 = vmatprep.subr.mxu0 %v1157
  %1253 = vmatpush1.msra.mxu0 %v1156
  %1254 = vmatprep.subr.mxu0 %v1153
  %1255 = vmatpush1.msra.mxu0 %v1152
  %1256 = vmatprep.subr.mxu0 %v1149
  %1257 = vmatpush1.msra.mxu0 %v1148
  %1258 = vmatprep.subr.mxu0 %v1145
  %1259 = vmatpush1.msra.mxu0 %v1144
  %1260 = vmatprep.subr.mxu0 %v1141
  %1261 = vmatpush1.msra.mxu0 %v1140
  %1262 = vmatprep.subr.mxu0 %v1137
  %1263 = vmatpush1.msra.mxu0 %v1136
  %1264 = vmatprep.subr.mxu0 %v1133
  %1265 = vmatpush1.msra.mxu0 %v1132
  %1266 = vmatprep.subr.mxu0 %v1129
  %1267 = vmatpush1.msra.mxu0 %v1128
  %1268 = vmatprep.subr.mxu0 %v1125
  %1269 = vmatpush1.msra.mxu0 %v1124
  %1270 = vmatprep.subr.mxu0 %v1121
  %1271 = vmatpush1.msra.mxu0 %v1120
  %1272 = vmatprep.subr.mxu0 %v1117
  %1273 = vmatpush1.msra.mxu0 %v1116
  %1274 = vmatprep.subr.mxu0 %v1113
  %1275 = vmatpush1.msra.mxu0 %v1112
  %1276 = vmatprep.subr.mxu0 %v1109
  %1277 = vmatpush1.msra.mxu0 %v1108
  %1278 = vmatprep.subr.mxu0 %v1105
  %1279 = vmatpush1.msra.mxu0 %v1104
  %1280 = vmatprep.subr.mxu0 %v1101
  %1281 = vmatpush1.msra.mxu0 %v1100
  %1282 = vmatprep.subr.mxu0 0.0
  %1283 = vmatpush2.msra.mxu0 0.0
  %1284 = vmatprep.subr.mxu0 0.0
  %1285 = vmatpush2.msra.mxu0 0.0
  %1286 = vmatprep.subr.mxu0 0.0
  %1287 = vmatpush2.msra.mxu0 0.0
  %1288 = vmatprep.subr.mxu0 0.0
  %1289 = vmatpush2.msra.mxu0 0.0
  %1290 = vmatprep.subr.mxu0 0.0
  %1291 = vmatpush2.msra.mxu0 0.0
  %1292 = vmatprep.subr.mxu0 0.0
  %1293 = vmatpush2.msra.mxu0 0.0
  %1294 = vmatprep.subr.mxu0 0.0
  %1295 = vmatpush2.msra.mxu0 0.0
  %1296 = vmatprep.subr.mxu0 0.0
  %1297 = vmatpush2.msra.mxu0 0.0
  %1298 = vmatprep.subr.mxu0 0.0
  %1299 = vmatpush2.msra.mxu0 0.0
  %1300 = vmatprep.subr.mxu0 0.0
  %1301 = vmatpush2.msra.mxu0 0.0
  %1302 = vmatprep.subr.mxu0 0.0
  %1303 = vmatpush2.msra.mxu0 0.0
  %1304 = vmatprep.subr.mxu0 0.0
  %1305 = vmatpush2.msra.mxu0 0.0
  %1306 = vmatprep.subr.mxu0 0.0
  %1307 = vmatpush2.msra.mxu0 0.0
  %1308 = vmatprep.subr.mxu0 0.0
  %1309 = vmatpush2.msra.mxu0 0.0
  %1310 = vmatprep.subr.mxu0 %v1169
  %1311 = vmatpush2.msra.mxu0 %v1168
  %1312 = vmatprep.subr.mxu0 %v1165
  %1313 = vmatpush2.msra.mxu0 %v1164
  %1314 = vmatprep.mubr.f32.mxu0 %v1177
  %1315 = vmatmul.mubr.f32.gmra.mxu0 %v1096
  %v1316 = vpop.f32.mrf.mxu0
  %v1317 = vadd.f32 %v1174, %v1316
  %v1318 = vpop.f32.mrf.mxu0
  %v1319 = vadd.f32 %v1174, %v1318
  %1320 = vdwg.mxu0
  %v1321 = vtanh.pop %v1246
  %v1322 = vtanh.pop %v1248
  %v1323 = vtanh.pop %v1317
  %v1324 = vtanh.pop %v1319
  %v1325 = vsub.f32 1.0, %v885
  %v1326 = vsub.f32 1.0, %v887
  %v1327 = vsub.f32 1.0, %v889
  %v1328 = vsub.f32 1.0, %v891
  %v1329 = vmul.f32 %v1325, %v28
  %v1330 = vmul.f32 %v1326, %v29
  %v1331 = vmul.f32 %v1327, %v30
  %v1332 = vmul.f32 %v1328, %v31
  %v1333 = vmul.f32 %v885, %v1321
  %v1334 = vmul.f32 %v887, %v1322
  %v1335 = vmul.f32 %v889, %v1323
  %v1336 = vmul.f32 %v891, %v1324
  %v1337 = vadd.f32 %v1329, %v1333
  %v1338 = vadd.f32 %v1330, %v1334
  %v1339 = vadd.f32 %v1331, %v1335
  %v1340 = vadd.f32 %v1332, %v1336
  %1341 = vst [vmem:[%s7] sm:$0xff] %v1337
  %1342 = vst [vmem:[%s7 + $0x8] sm:$0xff] %v1338
  %1343 = vst [vmem:[%s7 + $0x10] sm:$0xff] %v1339
  %1344 = vst [vmem:[%s7 + $0x18] sm:$0xff] %v1340
  // Predicated region
  $region30: #{conv_gru_cell_pallas.1} parent=0 // pred_check
    _
  $region31: #{conv_gru_cell_pallas.1} parent=0 // pred_check_branch
    %1346 = sbr.rel (0) target = $region33
  $region32: #{conv_gru_cell_pallas.1} parent=0 // pred_region
    _
  $region33: #{conv_gru_cell_pallas.1} parent=0 // pred_fallthru
    _
  // Predicated region
  $region34: #{conv_gru_cell_pallas.1} parent=0 // pred_check
    _
  $region35: #{conv_gru_cell_pallas.1} parent=0 // pred_check_branch
    %1348 = sbr.rel (0) target = $region37
  $region36: #{conv_gru_cell_pallas.1} parent=0 // pred_region
    _
  $region37: #{conv_gru_cell_pallas.1} parent=0 // pred_fallthru
    _

</llo_original>
